<compile_context>
chip_gen: v6e
topology: v6e:2x2x1
jax: 0.10.0
libtpu: 0.0.40
codegen_flags: <defaults>
</compile_context>

<pallas_src>
import functools

import jax
import jax.numpy as jnp
from jax.experimental import pallas as pl
from jax.experimental.pallas import tpu as pltpu

LANE = 128   # lane width (last dim)
SUB = 8      # sublane width (second-to-last dim)


def _round_up(x, m):
    return (x + m - 1) // m * m


def _leaky(v, slope=0.1):
    return jnp.where(v >= 0, v, slope * v)


# -----------------------------------------------------------------------------
# Kernel
# -----------------------------------------------------------------------------
def _bottleneck_kernel(x_ref,        # (1, TL, Cin_p)      current L tile
                       xlo_ref,      # (1, 8,  Cin_p)      8 rows just before tile
                       xhi_ref,      # (1, 8,  Cin_p)      8 rows just after tile
                       w_in_ref,     # (Cin_p, Cmid_p)     conv1x1 (BN1 folded)
                       b1_ref,       # (1, Cmid_p)
                       w3_ref,       # (3, Cmid_p, Cmid_p) k=3 conv (BN2+bias folded)
                       b2_ref,       # (1, Cmid_p)
                       w_out_ref,    # (Cmid_p, Cout_p)    conv1x1 (BN3 folded)
                       b3_ref,       # (1, Cout_p)
                       w_ds_ref,     # (Cin_p, Cout_p)     downsample conv (BN folded)
                       bds_ref,      # (1, Cout_p)
                       o_ref,        # (1, TL, Cout_p)
                       *, tl, l_true):
    t = pl.program_id(1)

    x = x_ref[0]                                   # (TL, Cin_p)
    w_in = w_in_ref[...]
    b1 = b1_ref[...]

    # ---- residual = down_sample(x): conv1x1 with folded BN ----
    residual = (jnp.dot(x, w_ds_ref[...], preferred_element_type=jnp.float32)
                + bds_ref[...])                    # (TL, Cout_p) f32

    # ---- conv_block_in: conv1x1 -> (folded BN) -> LeakyReLU(0.1) ----
    h1 = _leaky(jnp.dot(x, w_in, preferred_element_type=jnp.float32) + b1)

    # h1 at the single rows just before / after this tile (cross-tile halo).
    h1_lo = _leaky(jnp.dot(xlo_ref[0], w_in, preferred_element_type=jnp.float32) + b1)
    h1_hi = _leaky(jnp.dot(xhi_ref[0], w_in, preferred_element_type=jnp.float32) + b1)
    prev_row = h1_lo[SUB - 1:SUB, :]               # global row  t*tl - 1
    next_row = h1_hi[0:1, :]                       # global row (t+1)*tl

    # Shifted copies of h1. pltpu.roll requires NON-NEGATIVE shifts:
    #   shift = 1     -> rows move down  (h_prev)
    #   shift = tl-1  -> == -1 (mod tl)  (h_next)
    row = jax.lax.broadcasted_iota(jnp.int32, h1.shape, 0)
    g = row + t * tl                               # global sequence position
    h_prev = pltpu.roll(h1, shift=1, axis=0)
    h_prev = jnp.where(row == 0, prev_row, h_prev)
    h_prev = jnp.where(g == 0, 0.0, h_prev)                  # zero pad at seq start
    h_next = pltpu.roll(h1, shift=tl - 1, axis=0)
    h_next = jnp.where(row == tl - 1, next_row, h_next)
    h_next = jnp.where(g >= l_true - 1, 0.0, h_next)         # zero pad at seq end

    # ---- conv_block_bottle: k=3 conv as three dot-accumulates, then folded
    #      BN (+ folded conv bias) and LeakyReLU(0.1). No lane-concat buffer. ----
    wdt = w3_ref.dtype
    h2 = (jnp.dot(h_prev.astype(wdt), w3_ref[0], preferred_element_type=jnp.float32)
          + jnp.dot(h1.astype(wdt), w3_ref[1], preferred_element_type=jnp.float32)
          + jnp.dot(h_next.astype(wdt), w3_ref[2], preferred_element_type=jnp.float32)
          + b2_ref[...])
    h2 = _leaky(h2)

    # ---- conv_block_out: conv1x1 + folded BN; add residual; final LeakyReLU ----
    h3 = (jnp.dot(h2.astype(w_out_ref.dtype), w_out_ref[...],
                  preferred_element_type=jnp.float32) + b3_ref[...])
    o_ref[0] = _leaky(h3 + residual).astype(o_ref.dtype)


# -----------------------------------------------------------------------------
# Parameter folding / padding (done once in the wrapper, not in the kernel)
# -----------------------------------------------------------------------------
def _fold_and_pad_params(p, cin_p, cmid_p, cout_p, compute_dtype):
    def pad_mat(w, r, c):
        return jnp.pad(w, ((0, r - w.shape[0]), (0, c - w.shape[1])))

    def pad_row(v, c):
        return jnp.pad(v, ((0, 0), (0, c - v.shape[1])))

    cmid = p["w_in"].shape[1]

    w_in = pad_mat(p["w_in"] * p["s1"], cin_p, cmid_p).astype(compute_dtype)
    b1 = pad_row(p["b1"], cmid_p)                              # stays f32

    w3 = p["w3"] * p["s2"]                                     # fold BN2 scale (out-ch)
    w3 = jnp.pad(w3, ((0, 0), (0, cmid_p - cmid), (0, cmid_p - cmid)))
    w3 = w3.astype(compute_dtype)                              # (3, Cmid_p, Cmid_p)
    b2 = pad_row(p["cb3"] * p["s2"] + p["b2"], cmid_p)         # fold conv bias into BN2

    w_out = pad_mat(p["w_out"] * p["s3"], cmid_p, cout_p).astype(compute_dtype)
    b3 = pad_row(p["b3"], cout_p)

    w_ds = pad_mat(p["w_ds"] * p["sds"], cin_p, cout_p).astype(compute_dtype)
    bds = pad_row(p["bds"], cout_p)

    return dict(w_in=w_in, b1=b1, w3=w3, b2=b2,
                w_out=w_out, b3=b3, w_ds=w_ds, bds=bds)


# -----------------------------------------------------------------------------
# Wrapper
# -----------------------------------------------------------------------------
def bottleneck_pallas(x_ncl, params, *, tile_l=None, compute_dtype=jnp.float32):
    """x_ncl: (B, Cin, L) float32 (PyTorch NCL layout). Returns (B, Cout, L)."""
    B, Cin, L = x_ncl.shape
    Cmid = params["w_in"].shape[1]
    Cout = params["w_out"].shape[1]

    cin_p = _round_up(Cin, LANE)
    cmid_p = _round_up(Cmid, LANE)
    cout_p = _round_up(Cout, LANE)

    if tile_l is None:
        tile_l = 512
    tl = _round_up(min(tile_l, _round_up(L, SUB)), SUB)        # L-tile, multiple of 8
    l_p = _round_up(L, tl)
    n_t = l_p // tl
    bpt = tl // SUB                                            # 8-row blocks per tile
    n_lblk = l_p // SUB

    # channels-last + lane/sublane padding
    x_nlc = jnp.transpose(x_ncl, (0, 2, 1))                    # (B, L, Cin)
    x_pad = jnp.pad(x_nlc, ((0, 0), (0, l_p - L), (0, cin_p - Cin))).astype(compute_dtype)

    fp = _fold_and_pad_params(params, cin_p, cmid_p, cout_p, compute_dtype)

    def const(shape):
        return pl.BlockSpec(shape, lambda b, t: (0,) * len(shape))

    grid_spec = pltpu.PrefetchScalarGridSpec(
        num_scalar_prefetch=0,
        grid=(B, n_t),
        in_specs=[
            # main activation tile
            pl.BlockSpec((1, tl, cin_p), lambda b, t: (b, t, 0)),
            # 8-row halo blocks just before / just after the tile (clamped;
            # edge cases are masked inside the kernel against the TRUE length)
            pl.BlockSpec((1, SUB, cin_p),
                         lambda b, t: (b, jnp.maximum(t * bpt - 1, 0), 0)),
            pl.BlockSpec((1, SUB, cin_p),
                         lambda b, t: (b, jnp.minimum((t + 1) * bpt, n_lblk - 1), 0)),
            # weights / biases (constant index maps -> DMA'd once)
            const((cin_p, cmid_p)), const((1, cmid_p)),
            const((3, cmid_p, cmid_p)), const((1, cmid_p)),
            const((cmid_p, cout_p)), const((1, cout_p)),
            const((cin_p, cout_p)), const((1, cout_p)),
        ],
        out_specs=pl.BlockSpec((1, tl, cout_p), lambda b, t: (b, t, 0)),
    )

    # Explicit VMEM budget: double-buffered activation tiles + weights + f32
    # intermediates, with margin; clamped to fit every generation (v7x: 64 MiB).
    itemsize = jnp.dtype(compute_dtype).itemsize
    act_bytes = 2 * (tl * cin_p + 2 * SUB * cin_p) * itemsize + 2 * tl * cout_p * 4
    w_bytes = 2 * ((cin_p * cmid_p + 3 * cmid_p * cmid_p
                    + cmid_p * cout_p + cin_p * cout_p) * itemsize
                   + (2 * cmid_p + 2 * cout_p) * 4)
    tmp_bytes = tl * (8 * cmid_p + 3 * cout_p) * 4
    vmem_limit = int(min(max(act_bytes + w_bytes + tmp_bytes + (4 << 20), 32 << 20),
                         64 << 20))

    kernel = functools.partial(_bottleneck_kernel, tl=tl, l_true=L)

    out_pad = pl.pallas_call(
        kernel,
        out_shape=jax.ShapeDtypeStruct((B, l_p, cout_p), jnp.float32),
        grid_spec=grid_spec,
        compiler_params=pltpu.CompilerParams(
            dimension_semantics=("parallel", "parallel"),
            vmem_limit_bytes=vmem_limit),
    )(x_pad, x_pad, x_pad,
      fp["w_in"], fp["b1"], fp["w3"], fp["b2"],
      fp["w_out"], fp["b3"], fp["w_ds"], fp["bds"])

    out = out_pad[:, :L, :Cout]                                # strip padding
    return jnp.transpose(out, (0, 2, 1))                       # back to (B, Cout, L)


# -----------------------------------------------------------------------------
# Params + pure-JAX reference
# -----------------------------------------------------------------------------
def _fold_bn(gamma, beta, mean, var, eps=1e-5):
    scale = gamma / jnp.sqrt(var + eps)
    bias = beta - mean * scale
    return scale[None, :], bias[None, :]


def make_params(key, in_channel, out_channel):
    ratio = 2
    mid = in_channel // ratio
    ks = jax.random.split(key, 16)

    def w(k, shape, scale=0.1):
        return scale * jax.random.normal(k, shape, dtype=jnp.float32)

    def bn(k, c):
        k1, k2, k3, k4 = jax.random.split(k, 4)
        gamma = 1.0 + 0.1 * jax.random.normal(k1, (c,), jnp.float32)
        beta = 0.1 * jax.random.normal(k2, (c,), jnp.float32)
        mean = 0.1 * jax.random.normal(k3, (c,), jnp.float32)
        var = 1.0 + 0.1 * jnp.abs(jax.random.normal(k4, (c,), jnp.float32))
        return _fold_bn(gamma, beta, mean, var)

    # conv weights stored transposed for channels-last matmul:
    # PyTorch Conv1d weight (Cout, Cin, K) -> (K, Cin, Cout) / (Cin, Cout) for K=1.
    w_in = w(ks[0], (in_channel, mid))                    # conv_block_in
    s1, b1 = bn(ks[1], mid)
    w3 = w(ks[2], (3, mid, mid))                          # conv_block_bottle (k=3)
    cb3 = w(ks[3], (1, mid))                              # its conv bias
    s2, b2 = bn(ks[4], mid)
    w_out = w(ks[5], (mid, out_channel))                  # conv_block_out
    s3, b3 = bn(ks[6], out_channel)
    w_ds = w(ks[7], (in_channel, out_channel))            # down_sample
    sds, bds = bn(ks[8], out_channel)

    return dict(w_in=w_in, s1=s1, b1=b1, w3=w3, cb3=cb3, s2=s2, b2=b2,
                w_out=w_out, s3=s3, b3=b3, w_ds=w_ds, sds=sds, bds=bds)


def bottleneck_ref(x_ncl, p):
    """Pure-JAX reference (same math, channels-last) for validation."""
    x = jnp.transpose(x_ncl, (0, 2, 1))                    # (B, L, Cin)
    residual = jnp.einsum("blc,cd->bld", x, p["w_ds"]) * p["sds"] + p["bds"]
    h1 = _leaky(jnp.einsum("blc,cd->bld", x, p["w_in"]) * p["s1"] + p["b1"])
    h_prev = jnp.pad(h1, ((0, 0), (1, 0), (0, 0)))[:, :-1]
    h_next = jnp.pad(h1, ((0, 0), (0, 1), (0, 0)))[:, 1:]
    h2 = (jnp.einsum("blc,cd->bld", h_prev, p["w3"][0])
          + jnp.einsum("blc,cd->bld", h1, p["w3"][1])
          + jnp.einsum("blc,cd->bld", h_next, p["w3"][2]) + p["cb3"])
    h2 = _leaky(h2 * p["s2"] + p["b2"])
    h3 = jnp.einsum("blc,cd->bld", h2, p["w_out"]) * p["s3"] + p["b3"]
    out = _leaky(h3 + residual)
    return jnp.transpose(out, (0, 2, 1))


if __name__ == "__main__":
    key = jax.random.PRNGKey(0)
    k_x, k_p = jax.random.split(key)

    B, C_IN, C_OUT, L = 2, 16, 32, 24
    x = jax.random.normal(k_x, (B, C_IN, L), dtype=jnp.float32)   # NCL like PyTorch
    params = make_params(k_p, C_IN, C_OUT)

    ref = bottleneck_ref(x, params)

    # 1) multi-L-tile path (exercises the k=3 cross-tile halo), f32 matmuls
    out = jax.block_until_ready(bottleneck_pallas(x, params, tile_l=8))
    assert out.shape == (B, C_OUT, L), out.shape
    assert jnp.allclose(out, ref, atol=1e-4, rtol=1e-4), \
        float(jnp.max(jnp.abs(out - ref)))

    # 2) default tiling with bf16 matmul inputs (f32 accumulation) — the
    #    recommended mode on v6e/v7x
    out_bf16 = jax.block_until_ready(
        bottleneck_pallas(x, params, compute_dtype=jnp.bfloat16))
    assert out_bf16.shape == (B, C_OUT, L), out_bf16.shape
    assert jnp.allclose(out_bf16, ref, atol=5e-2, rtol=5e-2), \
        float(jnp.max(jnp.abs(out_bf16 - ref)))

    print("KERNEL_OK")
</pallas_src>

<mosaic_0001>
module attributes {stable_mosaic.version = 11 : i64} {
  func.func @_bottleneck_kernel(%arg0: i32, %arg1: i32, %arg2: memref<1x8x128xf32, #tpu.memory_space<vmem>>, %arg3: memref<1x8x128xf32, #tpu.memory_space<vmem>>, %arg4: memref<1x8x128xf32, #tpu.memory_space<vmem>>, %arg5: memref<128x128xf32, #tpu.memory_space<vmem>>, %arg6: memref<1x128xf32, #tpu.memory_space<vmem>>, %arg7: memref<3x128x128xf32, #tpu.memory_space<vmem>>, %arg8: memref<1x128xf32, #tpu.memory_space<vmem>>, %arg9: memref<128x128xf32, #tpu.memory_space<vmem>>, %arg10: memref<1x128xf32, #tpu.memory_space<vmem>>, %arg11: memref<128x128xf32, #tpu.memory_space<vmem>>, %arg12: memref<1x128xf32, #tpu.memory_space<vmem>>, %arg13: memref<1x8x128xf32, #tpu.memory_space<vmem>>) attributes {dimension_semantics = [#tpu.dimension_semantics<parallel>, #tpu.dimension_semantics<parallel>], iteration_bounds = array<i64: 2, 3>, scalar_prefetch = 0 : i64, scratch_operands = 0 : i64, tpu.core_type = #tpu.core_type<tc>, window_params = [{transform_indices = @transform_0, window_bounds = array<i64: 1, 8, 128>}, {transform_indices = @transform_1, window_bounds = array<i64: 1, 8, 128>}, {transform_indices = @transform_2, window_bounds = array<i64: 1, 8, 128>}, {pipeline_mode = #tpu.pipeline_mode<synchronous>, transform_indices = @transform_3, window_bounds = array<i64: 128, 128>}, {pipeline_mode = #tpu.pipeline_mode<synchronous>, transform_indices = @transform_4, window_bounds = array<i64: 1, 128>}, {pipeline_mode = #tpu.pipeline_mode<synchronous>, transform_indices = @transform_5, window_bounds = array<i64: 3, 128, 128>}, {pipeline_mode = #tpu.pipeline_mode<synchronous>, transform_indices = @transform_6, window_bounds = array<i64: 1, 128>}, {pipeline_mode = #tpu.pipeline_mode<synchronous>, transform_indices = @transform_7, window_bounds = array<i64: 128, 128>}, {pipeline_mode = #tpu.pipeline_mode<synchronous>, transform_indices = @transform_8, window_bounds = array<i64: 1, 128>}, {pipeline_mode = #tpu.pipeline_mode<synchronous>, transform_indices = @transform_9, window_bounds = array<i64: 128, 128>}, {pipeline_mode = #tpu.pipeline_mode<synchronous>, transform_indices = @transform_10, window_bounds = array<i64: 1, 128>}, {transform_indices = @transform_11, window_bounds = array<i64: 1, 8, 128>}]} {
    %c0 = arith.constant 0 : index
    %c0_0 = arith.constant 0 : index
    %c0_1 = arith.constant 0 : index
    %0 = vector.load %arg2[%c0, %c0_0, %c0_1] : memref<1x8x128xf32, #tpu.memory_space<vmem>>, vector<1x8x128xf32>
    %1 = vector.shape_cast %0 : vector<1x8x128xf32> to vector<8x128xf32>
    %c0_2 = arith.constant 0 : index
    %c0_3 = arith.constant 0 : index
    %2 = vector.load %arg5[%c0_2, %c0_3] : memref<128x128xf32, #tpu.memory_space<vmem>>, vector<128x128xf32>
    %c0_4 = arith.constant 0 : index
    %c0_5 = arith.constant 0 : index
    %3 = vector.load %arg6[%c0_4, %c0_5] : memref<1x128xf32, #tpu.memory_space<vmem>>, vector<1x128xf32>
    %c0_6 = arith.constant 0 : index
    %c0_7 = arith.constant 0 : index
    %4 = vector.load %arg11[%c0_6, %c0_7] : memref<128x128xf32, #tpu.memory_space<vmem>>, vector<128x128xf32>
    %cst = arith.constant dense<0.000000e+00> : vector<8x128xf32>
    %5 = tpu.matmul %1, %4, %cst {dimension_numbers = #tpu.dot_dimension_numbers<[1], [0], [0], [1], [0, 0, 1, 1], [], []>} : vector<8x128xf32>, vector<128x128xf32>, vector<8x128xf32> -> vector<8x128xf32>
    %c0_8 = arith.constant 0 : index
    %c0_9 = arith.constant 0 : index
    %6 = vector.load %arg12[%c0_8, %c0_9] : memref<1x128xf32, #tpu.memory_space<vmem>>, vector<1x128xf32>
    %7 = vector.broadcast %6 : vector<1x128xf32> to vector<8x128xf32>
    %8 = arith.addf %5, %7 : vector<8x128xf32>
    %cst_10 = arith.constant dense<0.000000e+00> : vector<8x128xf32>
    %9 = tpu.matmul %1, %2, %cst_10 {dimension_numbers = #tpu.dot_dimension_numbers<[1], [0], [0], [1], [0, 0, 1, 1], [], []>} : vector<8x128xf32>, vector<128x128xf32>, vector<8x128xf32> -> vector<8x128xf32>
    %10 = vector.broadcast %3 : vector<1x128xf32> to vector<8x128xf32>
    %11 = arith.addf %9, %10 : vector<8x128xf32>
    %cst_11 = arith.constant 0.000000e+00 : f32
    %12 = vector.broadcast %cst_11 : f32 to vector<8x128xf32>
    %13 = arith.cmpf oge, %11, %12 : vector<8x128xf32>
    %cst_12 = arith.constant 1.000000e-01 : f32
    %14 = vector.broadcast %cst_12 : f32 to vector<8x128xf32>
    %15 = arith.mulf %14, %11 : vector<8x128xf32>
    %16 = arith.select %13, %11, %15 : vector<8x128xi1>, vector<8x128xf32>
    %c0_13 = arith.constant 0 : index
    %c0_14 = arith.constant 0 : index
    %c0_15 = arith.constant 0 : index
    %17 = vector.load %arg3[%c0_13, %c0_14, %c0_15] : memref<1x8x128xf32, #tpu.memory_space<vmem>>, vector<1x8x128xf32>
    %18 = vector.shape_cast %17 : vector<1x8x128xf32> to vector<8x128xf32>
    %cst_16 = arith.constant dense<0.000000e+00> : vector<8x128xf32>
    %19 = tpu.matmul %18, %2, %cst_16 {dimension_numbers = #tpu.dot_dimension_numbers<[1], [0], [0], [1], [0, 0, 1, 1], [], []>} : vector<8x128xf32>, vector<128x128xf32>, vector<8x128xf32> -> vector<8x128xf32>
    %20 = vector.broadcast %3 : vector<1x128xf32> to vector<8x128xf32>
    %21 = arith.addf %19, %20 : vector<8x128xf32>
    %cst_17 = arith.constant 0.000000e+00 : f32
    %22 = vector.broadcast %cst_17 : f32 to vector<8x128xf32>
    %23 = arith.cmpf oge, %21, %22 : vector<8x128xf32>
    %cst_18 = arith.constant 1.000000e-01 : f32
    %24 = vector.broadcast %cst_18 : f32 to vector<8x128xf32>
    %25 = arith.mulf %24, %21 : vector<8x128xf32>
    %26 = arith.select %23, %21, %25 : vector<8x128xi1>, vector<8x128xf32>
    %c0_19 = arith.constant 0 : index
    %c0_20 = arith.constant 0 : index
    %c0_21 = arith.constant 0 : index
    %27 = vector.load %arg4[%c0_19, %c0_20, %c0_21] : memref<1x8x128xf32, #tpu.memory_space<vmem>>, vector<1x8x128xf32>
    %28 = vector.shape_cast %27 : vector<1x8x128xf32> to vector<8x128xf32>
    %cst_22 = arith.constant dense<0.000000e+00> : vector<8x128xf32>
    %29 = tpu.matmul %28, %2, %cst_22 {dimension_numbers = #tpu.dot_dimension_numbers<[1], [0], [0], [1], [0, 0, 1, 1], [], []>} : vector<8x128xf32>, vector<128x128xf32>, vector<8x128xf32> -> vector<8x128xf32>
    %30 = vector.broadcast %3 : vector<1x128xf32> to vector<8x128xf32>
    %31 = arith.addf %29, %30 : vector<8x128xf32>
    %cst_23 = arith.constant 0.000000e+00 : f32
    %32 = vector.broadcast %cst_23 : f32 to vector<8x128xf32>
    %33 = arith.cmpf oge, %31, %32 : vector<8x128xf32>
    %cst_24 = arith.constant 1.000000e-01 : f32
    %34 = vector.broadcast %cst_24 : f32 to vector<8x128xf32>
    %35 = arith.mulf %34, %31 : vector<8x128xf32>
    %36 = arith.select %33, %31, %35 : vector<8x128xi1>, vector<8x128xf32>
    %37 = vector.extract_strided_slice %26 {offsets = [7, 0], sizes = [1, 128], strides = [1, 1]} : vector<8x128xf32> to vector<1x128xf32>
    %38 = vector.extract_strided_slice %36 {offsets = [0, 0], sizes = [1, 128], strides = [1, 1]} : vector<8x128xf32> to vector<1x128xf32>
    %39 = tpu.iota {dimensions = array<i32: 0>} : vector<8x128xi32>
    %c8_i32 = arith.constant 8 : i32
    %40 = arith.muli %arg1, %c8_i32 : i32
    %41 = vector.broadcast %40 : i32 to vector<8x128xi32>
    %42 = arith.addi %39, %41 : vector<8x128xi32>
    %c1_i32 = arith.constant 1 : i32
    %43 = tpu.dynamic_rotate %16 by %c1_i32 dim 0 : vector<8x128xf32>, i32 -> vector<8x128xf32>
    %c0_i32 = arith.constant 0 : i32
    %44 = vector.broadcast %c0_i32 : i32 to vector<8x128xi32>
    %45 = arith.cmpi eq, %39, %44 : vector<8x128xi32>
    %46 = vector.shape_cast %37 : vector<1x128xf32> to vector<1x128xf32>
    %47 = vector.broadcast %46 : vector<1x128xf32> to vector<8x128xf32>
    %48 = arith.select %45, %47, %43 : vector<8x128xi1>, vector<8x128xf32>
    %c0_i32_25 = arith.constant 0 : i32
    %49 = vector.broadcast %c0_i32_25 : i32 to vector<8x128xi32>
    %50 = arith.cmpi eq, %42, %49 : vector<8x128xi32>
    %cst_26 = arith.constant 0.000000e+00 : f32
    %51 = vector.broadcast %cst_26 : f32 to vector<8x128xf32>
    %52 = arith.select %50, %51, %48 : vector<8x128xi1>, vector<8x128xf32>
    %c7_i32 = arith.constant 7 : i32
    %53 = tpu.dynamic_rotate %16 by %c7_i32 dim 0 : vector<8x128xf32>, i32 -> vector<8x128xf32>
    %c7_i32_27 = arith.constant 7 : i32
    %54 = vector.broadcast %c7_i32_27 : i32 to vector<8x128xi32>
    %55 = arith.cmpi eq, %39, %54 : vector<8x128xi32>
    %56 = vector.shape_cast %38 : vector<1x128xf32> to vector<1x128xf32>
    %57 = vector.broadcast %56 : vector<1x128xf32> to vector<8x128xf32>
    %58 = arith.select %55, %57, %53 : vector<8x128xi1>, vector<8x128xf32>
    %c23_i32 = arith.constant 23 : i32
    %59 = vector.broadcast %c23_i32 : i32 to vector<8x128xi32>
    %60 = arith.cmpi sge, %42, %59 : vector<8x128xi32>
    %cst_28 = arith.constant 0.000000e+00 : f32
    %61 = vector.broadcast %cst_28 : f32 to vector<8x128xf32>
    %62 = arith.select %60, %61, %58 : vector<8x128xi1>, vector<8x128xf32>
    %c0_29 = arith.constant 0 : index
    %c0_30 = arith.constant 0 : index
    %c0_31 = arith.constant 0 : index
    %63 = vector.load %arg7[%c0_29, %c0_30, %c0_31] : memref<3x128x128xf32, #tpu.memory_space<vmem>>, vector<1x128x128xf32>
    %64 = vector.shape_cast %63 : vector<1x128x128xf32> to vector<128x128xf32>
    %cst_32 = arith.constant dense<0.000000e+00> : vector<8x128xf32>
    %65 = tpu.matmul %52, %64, %cst_32 {dimension_numbers = #tpu.dot_dimension_numbers<[1], [0], [0], [1], [0, 0, 1, 1], [], []>} : vector<8x128xf32>, vector<128x128xf32>, vector<8x128xf32> -> vector<8x128xf32>
    %c1 = arith.constant 1 : index
    %c0_33 = arith.constant 0 : index
    %c0_34 = arith.constant 0 : index
    %66 = vector.load %arg7[%c1, %c0_33, %c0_34] : memref<3x128x128xf32, #tpu.memory_space<vmem>>, vector<1x128x128xf32>
    %67 = vector.shape_cast %66 : vector<1x128x128xf32> to vector<128x128xf32>
    %cst_35 = arith.constant dense<0.000000e+00> : vector<8x128xf32>
    %68 = tpu.matmul %16, %67, %cst_35 {dimension_numbers = #tpu.dot_dimension_numbers<[1], [0], [0], [1], [0, 0, 1, 1], [], []>} : vector<8x128xf32>, vector<128x128xf32>, vector<8x128xf32> -> vector<8x128xf32>
    %69 = arith.addf %65, %68 : vector<8x128xf32>
    %c2 = arith.constant 2 : index
    %c0_36 = arith.constant 0 : index
    %c0_37 = arith.constant 0 : index
    %70 = vector.load %arg7[%c2, %c0_36, %c0_37] : memref<3x128x128xf32, #tpu.memory_space<vmem>>, vector<1x128x128xf32>
    %71 = vector.shape_cast %70 : vector<1x128x128xf32> to vector<128x128xf32>
    %cst_38 = arith.constant dense<0.000000e+00> : vector<8x128xf32>
    %72 = tpu.matmul %62, %71, %cst_38 {dimension_numbers = #tpu.dot_dimension_numbers<[1], [0], [0], [1], [0, 0, 1, 1], [], []>} : vector<8x128xf32>, vector<128x128xf32>, vector<8x128xf32> -> vector<8x128xf32>
    %73 = arith.addf %69, %72 : vector<8x128xf32>
    %c0_39 = arith.constant 0 : index
    %c0_40 = arith.constant 0 : index
    %74 = vector.load %arg8[%c0_39, %c0_40] : memref<1x128xf32, #tpu.memory_space<vmem>>, vector<1x128xf32>
    %75 = vector.broadcast %74 : vector<1x128xf32> to vector<8x128xf32>
    %76 = arith.addf %73, %75 : vector<8x128xf32>
    %cst_41 = arith.constant 0.000000e+00 : f32
    %77 = vector.broadcast %cst_41 : f32 to vector<8x128xf32>
    %78 = arith.cmpf oge, %76, %77 : vector<8x128xf32>
    %cst_42 = arith.constant 1.000000e-01 : f32
    %79 = vector.broadcast %cst_42 : f32 to vector<8x128xf32>
    %80 = arith.mulf %79, %76 : vector<8x128xf32>
    %81 = arith.select %78, %76, %80 : vector<8x128xi1>, vector<8x128xf32>
    %c0_43 = arith.constant 0 : index
    %c0_44 = arith.constant 0 : index
    %82 = vector.load %arg9[%c0_43, %c0_44] : memref<128x128xf32, #tpu.memory_space<vmem>>, vector<128x128xf32>
    %cst_45 = arith.constant dense<0.000000e+00> : vector<8x128xf32>
    %83 = tpu.matmul %81, %82, %cst_45 {dimension_numbers = #tpu.dot_dimension_numbers<[1], [0], [0], [1], [0, 0, 1, 1], [], []>} : vector<8x128xf32>, vector<128x128xf32>, vector<8x128xf32> -> vector<8x128xf32>
    %c0_46 = arith.constant 0 : index
    %c0_47 = arith.constant 0 : index
    %84 = vector.load %arg10[%c0_46, %c0_47] : memref<1x128xf32, #tpu.memory_space<vmem>>, vector<1x128xf32>
    %85 = vector.broadcast %84 : vector<1x128xf32> to vector<8x128xf32>
    %86 = arith.addf %83, %85 : vector<8x128xf32>
    %87 = arith.addf %86, %8 : vector<8x128xf32>
    %cst_48 = arith.constant 0.000000e+00 : f32
    %88 = vector.broadcast %cst_48 : f32 to vector<8x128xf32>
    %89 = arith.cmpf oge, %87, %88 : vector<8x128xf32>
    %cst_49 = arith.constant 1.000000e-01 : f32
    %90 = vector.broadcast %cst_49 : f32 to vector<8x128xf32>
    %91 = arith.mulf %90, %87 : vector<8x128xf32>
    %92 = arith.select %89, %87, %91 : vector<8x128xi1>, vector<8x128xf32>
    %c0_50 = arith.constant 0 : index
    %c0_51 = arith.constant 0 : index
    %c0_52 = arith.constant 0 : index
    %93 = vector.load %arg13[%c0_50, %c0_51, %c0_52] : memref<1x8x128xf32, #tpu.memory_space<vmem>>, vector<1x8x128xf32>
    %94 = vector.shape_cast %93 : vector<1x8x128xf32> to vector<8x128xf32>
    %95 = vector.shape_cast %92 : vector<8x128xf32> to vector<1x8x128xf32>
    tpu.vector_store %arg13[%c0_50, %c0_51, %c0_52], %95 {strides = array<i32>} : memref<1x8x128xf32, #tpu.memory_space<vmem>>, vector<1x8x128xf32>,
    return
  }
  func.func @transform_0(%arg0: i32, %arg1: i32) -> (i32, i32, i32) {
    %c0_i32 = arith.constant 0 : i32
    %c0_i32_0 = arith.constant 0 : i32
    return %arg0, %arg1, %c0_i32 : i32, i32, i32
  }
  func.func @transform_1(%arg0: i32, %arg1: i32) -> (i32, i32, i32) {
    %c1_i32 = arith.constant 1 : i32
    %0 = arith.muli %arg1, %c1_i32 : i32
    %c1_i32_0 = arith.constant 1 : i32
    %1 = arith.subi %0, %c1_i32_0 : i32
    %c0_i32 = arith.constant 0 : i32
    %2 = arith.maxsi %1, %c0_i32 : i32
    %c0_i32_1 = arith.constant 0 : i32
    %c0_i32_2 = arith.constant 0 : i32
    return %arg0, %2, %c0_i32_1 : i32, i32, i32
  }
  func.func @transform_2(%arg0: i32, %arg1: i32) -> (i32, i32, i32) {
    %c1_i32 = arith.constant 1 : i32
    %0 = arith.addi %arg1, %c1_i32 : i32
    %c1_i32_0 = arith.constant 1 : i32
    %1 = arith.muli %0, %c1_i32_0 : i32
    %c2_i32 = arith.constant 2 : i32
    %2 = arith.minsi %1, %c2_i32 : i32
    %c0_i32 = arith.constant 0 : i32
    %c0_i32_1 = arith.constant 0 : i32
    return %arg0, %2, %c0_i32 : i32, i32, i32
  }
  func.func @transform_3(%arg0: i32, %arg1: i32) -> (i32, i32) {
    %c0_i32 = arith.constant 0 : i32
    %c0_i32_0 = arith.constant 0 : i32
    %c0_i32_1 = arith.constant 0 : i32
    return %c0_i32, %c0_i32_0 : i32, i32
  }
  func.func @transform_4(%arg0: i32, %arg1: i32) -> (i32, i32) {
    %c0_i32 = arith.constant 0 : i32
    %c0_i32_0 = arith.constant 0 : i32
    %c0_i32_1 = arith.constant 0 : i32
    return %c0_i32, %c0_i32_0 : i32, i32
  }
  func.func @transform_5(%arg0: i32, %arg1: i32) -> (i32, i32, i32) {
    %c0_i32 = arith.constant 0 : i32
    %c0_i32_0 = arith.constant 0 : i32
    %c0_i32_1 = arith.constant 0 : i32
    %c0_i32_2 = arith.constant 0 : i32
    return %c0_i32, %c0_i32_0, %c0_i32_1 : i32, i32, i32
  }
  func.func @transform_6(%arg0: i32, %arg1: i32) -> (i32, i32) {
    %c0_i32 = arith.constant 0 : i32
    %c0_i32_0 = arith.constant 0 : i32
    %c0_i32_1 = arith.constant 0 : i32
    return %c0_i32, %c0_i32_0 : i32, i32
  }
  func.func @transform_7(%arg0: i32, %arg1: i32) -> (i32, i32) {
    %c0_i32 = arith.constant 0 : i32
    %c0_i32_0 = arith.constant 0 : i32
    %c0_i32_1 = arith.constant 0 : i32
    return %c0_i32, %c0_i32_0 : i32, i32
  }
  func.func @transform_8(%arg0: i32, %arg1: i32) -> (i32, i32) {
    %c0_i32 = arith.constant 0 : i32
    %c0_i32_0 = arith.constant 0 : i32
    %c0_i32_1 = arith.constant 0 : i32
    return %c0_i32, %c0_i32_0 : i32, i32
  }
  func.func @transform_9(%arg0: i32, %arg1: i32) -> (i32, i32) {
    %c0_i32 = arith.constant 0 : i32
    %c0_i32_0 = arith.constant 0 : i32
    %c0_i32_1 = arith.constant 0 : i32
    return %c0_i32, %c0_i32_0 : i32, i32
  }
  func.func @transform_10(%arg0: i32, %arg1: i32) -> (i32, i32) {
    %c0_i32 = arith.constant 0 : i32
    %c0_i32_0 = arith.constant 0 : i32
    %c0_i32_1 = arith.constant 0 : i32
    return %c0_i32, %c0_i32_0 : i32, i32
  }
  func.func @transform_11(%arg0: i32, %arg1: i32) -> (i32, i32, i32) {
    %c0_i32 = arith.constant 0 : i32
    %c0_i32_0 = arith.constant 0 : i32
    return %arg0, %arg1, %c0_i32 : i32, i32, i32
  }
}

</mosaic_0001>

<llo_original>
// kernel: tpu_custom_call.1
$region0: #{tpu_custom_call.1}
  #allocation0 [shape = 'u32[]', space=smem, size = 0x4, offset = 0x4, fixed_abs, tag = 'smem constant byte address 0x4 - core index']
  #allocation1 [shape = 'u32[144,128]{1,0:T(1,128)}', space=vmem, size = 0x12000, scoped, tag = 'internal scratch']
  %s0 = inlined_call_operand.hbm [shape: f32[2,24,128], index: 0, kind: input, shape index: {}]
  %s1 = inlined_call_operand.hbm [shape: f32[2,24,128], index: 1, kind: input, shape index: {}]
  %s2 = inlined_call_operand.hbm [shape: f32[2,24,128], index: 2, kind: input, shape index: {}]
  %s3 = inlined_call_operand.hbm [shape: f32[128,128], index: 3, kind: input, shape index: {}]
  %s4 = inlined_call_operand.vmem [shape: f32[1,128], index: 4, kind: input, shape index: {}]
  %s5 = inlined_call_operand.hbm [shape: f32[3,128,128], index: 5, kind: input, shape index: {}]
  %s6 = inlined_call_operand.vmem [shape: f32[1,128], index: 6, kind: input, shape index: {}]
  %s7 = inlined_call_operand.hbm [shape: f32[128,128], index: 7, kind: input, shape index: {}]
  %s8 = inlined_call_operand.vmem [shape: f32[1,128], index: 8, kind: input, shape index: {}]
  %s9 = inlined_call_operand.hbm [shape: f32[128,128], index: 9, kind: input, shape index: {}]
  %s10 = inlined_call_operand.vmem [shape: f32[1,128], index: 10, kind: input, shape index: {}]
  %s11 = inlined_call_operand.hbm [shape: f32[2,24,128], index: 11, kind: output, shape index: {}]
  %s12 = sld [smem:[#allocation0]]
  $region105: #{tpu_custom_call.1} parent=0
    _
  %s14 = ssub.s32 1, %s12
  %s15 = scalar_select 0, %s14, %s12
  $region1: #{tpu_custom_call.1} parent=0
    #allocation2 [shape = 'u8[8192]{0}', space=vmem, size = 0x2000, scoped, tag = 'input window, operand 0']
    #allocation3 [shape = 's32[2]{0}', space=sflag, size = 0x8, scoped, tag = 'scoped memory for tpu_custom_call.1']
    #allocation4 [shape = 's32[2]{0}', space=sflag, size = 0x8, scoped, tag = 'scoped memory for tpu_custom_call.1']
    #allocation5 [shape = 'u8[8192]{0}', space=vmem, size = 0x2000, scoped, tag = 'input window, operand 1']
    #allocation6 [shape = 's32[2]{0}', space=sflag, size = 0x8, scoped, tag = 'scoped memory for tpu_custom_call.1']
    #allocation7 [shape = 'u8[8192]{0}', space=vmem, size = 0x2000, scoped, tag = 'input window, operand 2']
    #allocation8 [shape = 'u8[65536]{0}', space=vmem, size = 0x10000, scoped, tag = 'input window, operand 3, single buffered']
    #allocation9 [shape = 's32[1]{0}', space=sflag, size = 0x4, scoped, tag = 'scoped memory for tpu_custom_call.1']
    #allocation10 [shape = 'u8[196608]{0}', space=vmem, size = 0x30000, scoped, tag = 'input window, operand 5, single buffered']
    #allocation11 [shape = 'u8[65536]{0}', space=vmem, size = 0x10000, scoped, tag = 'input window, operand 7, single buffered']
    #allocation12 [shape = 's32[1]{0}', space=sflag, size = 0x4, scoped, tag = 'scoped memory for tpu_custom_call.1']
    #allocation13 [shape = 'u8[65536]{0}', space=vmem, size = 0x10000, scoped, tag = 'input window, operand 9, single buffered']
    #allocation14 [shape = 'u8[8192]{0}', space=vmem, size = 0x2000, scoped, tag = 'output window, operand 0']
    %16 = vsyncpa [#allocation3], 0
    %s17 = scalar_lea.sflag [#allocation3], 1
    %18 = vsyncpa %s17, 0
    %19 = vsyncpa [#allocation6], 0
    %s20 = scalar_lea.sflag [#allocation6], 1
    %21 = vsyncpa %s20, 0
    %22 = vsyncpa [#allocation9], 0
    %23 = vsyncpa [#allocation12], 0
    %24 = vsyncpa [#allocation4], 0
    %s25 = scalar_lea.sflag [#allocation4], 1
    %26 = vsyncpa %s25, 0
    loop: start=0, step=1, limit=8
    $region2: #{tpu_custom_call.1} parent=1 // loop_pre_header
      _
    $region3: #{tpu_custom_call.1} parent=1 // loop_header
      %s28 = sphi 0, %s32
      %p29 = scmp.ge.s32.totalorder %s28, 8
      %s35 = sphi 0, %s47
      %s36 = sphi 0, %s43
      %s37 = sphi 0, %s35
      %s38 = sphi 0, %s36
      %s39 = sphi 0, %s37
      %s40 = sphi 0, %s38
      %s52 = sphi 0, %s54
      %s55 = sphi 0, %s52
      %s56 = sphi 0, %s55
      %s72 = sphi 0, %s56
      %s86 = sphi 0, %s88
      %s89 = sphi 0, %s86
      %s90 = sphi 0, %s89
      %s106 = sphi 0, %s90
      %s120 = sphi 0, %s122
      %s123 = sphi 0, %s120
      %s124 = sphi 0, %s123
      %s140 = sphi 0, %s124
      %s144 = sphi 0, %s144
      %s146 = sphi 0, %s144
      %s147 = sphi 0, %s146
      %s161 = sphi 0, %s147
      %s165 = sphi 0, %s165
      %s167 = sphi 0, %s165
      %s168 = sphi 0, %s167
      %s182 = sphi 0, %s168
      %s186 = sphi 0, %s186
      %s188 = sphi 0, %s186
      %s189 = sphi 0, %s188
      %s203 = sphi 0, %s189
      %s207 = sphi 0, %s207
      %s209 = sphi 0, %s207
      %s210 = sphi 0, %s209
      %s224 = sphi 0, %s210
      %s228 = sphi 0, %s228
      %s230 = sphi 0, %s228
      %s231 = sphi 0, %s230
      %s245 = sphi 0, %s231
      %s249 = sphi 0, %s249
      %s251 = sphi 0, %s249
      %s252 = sphi 0, %s251
      %s266 = sphi 0, %s252
      %s270 = sphi 0, %s270
      %s272 = sphi 0, %s270
      %s273 = sphi 0, %s272
      %s287 = sphi 0, %s273
      %s291 = sphi 0, %s291
      %s293 = sphi 0, %s291
      %s294 = sphi 0, %s293
      %s308 = sphi 0, %s294
      %s316 = sphi 0, %s318
      %s319 = sphi 0, %s316
      %s320 = sphi 0, %s319
      %s336 = sphi 0, %s320
    $region4: #{tpu_custom_call.1} parent=1 // loop_header_branch
      %31 = sbr.rel (%p29) target = $region8
    $region5: #{tpu_custom_call.1} parent=1 // loop_body
      %s33 = ssub.s32 %s28, 1
      %s34 = ssub.s32 %s28, 2
      %s41 = sadd.s32 1, %s36
      %p42 = scmp.ge.s32.totalorder %s41, 3
      %s43 = scalar_select %p42, 0, %s41
      %s44 = sadd.s32 1, %s35
      %s45 = scalar_select %p42, %s44, %s35
      %p46 = scmp.ge.s32.totalorder %s45, 2
      %s47 = scalar_select %p46, 0, %s45
      %s48 = ssub.s32 %s35, %s47
      %s49 = ssub.s32 %s36, %s43
      %s50 = sor.u32 %s48, %s49
      %p51 = scmp.eq.s32.totalorder %s50, 0
      %s53 = sadd.s32 %s52, 1
      %s54 = scalar_select %p51, %s52, %s53
      %p57 = pneg %p51
      %p58 = scmp.eq.s32.totalorder %s28, 5
      %p59 = por %p57, %p58
      %p60 = scmp.ne.s32.totalorder %s52, %s55
      %p61 = scmp.eq.s32.totalorder %s28, 0
      %p62 = por %p60, %p61
      %p63 = scmp.ne.s32.totalorder %s52, %s55
      %p64 = scmp.eq.s32.totalorder %s33, 5
      %p65 = por %p63, %p64
      %p66 = scmp.ne.s32.totalorder %s55, %s56
      %p67 = scmp.eq.s32.totalorder %s33, 0
      %p68 = por %p66, %p67
      %p69 = scmp.ne.s32.totalorder %s55, %s56
      %p70 = scmp.eq.s32.totalorder %s34, 5
      %p71 = por %p69, %p70
      %p73 = scmp.ne.s32.totalorder %s56, %s72
      %p74 = scmp.eq.s32.totalorder %s34, 0
      %p75 = por %p73, %p74
      %s76 = ssub.s32 %s36, 1
      %p77 = scmp.gt.s32.totalorder %s76, 0
      %s78 = scalar_select %p77, %s76, 0
      %s79 = ssub.s32 %s43, 1
      %p80 = scmp.gt.s32.totalorder %s79, 0
      %s81 = scalar_select %p80, %s79, 0
      %s82 = ssub.s32 %s35, %s47
      %s83 = ssub.s32 %s78, %s81
      %s84 = sor.u32 %s82, %s83
      %p85 = scmp.eq.s32.totalorder %s84, 0
      %s87 = sadd.s32 %s86, 1
      %s88 = scalar_select %p85, %s86, %s87
      %p91 = pneg %p85
      %p92 = scmp.eq.s32.totalorder %s28, 5
      %p93 = por %p91, %p92
      %p94 = scmp.ne.s32.totalorder %s86, %s89
      %p95 = scmp.eq.s32.totalorder %s28, 0
      %p96 = por %p94, %p95
      %p97 = scmp.ne.s32.totalorder %s86, %s89
      %p98 = scmp.eq.s32.totalorder %s33, 5
      %p99 = por %p97, %p98
      %p100 = scmp.ne.s32.totalorder %s89, %s90
      %p101 = scmp.eq.s32.totalorder %s33, 0
      %p102 = por %p100, %p101
      %p103 = scmp.ne.s32.totalorder %s89, %s90
      %p104 = scmp.eq.s32.totalorder %s34, 5
      %p105 = por %p103, %p104
      %p107 = scmp.ne.s32.totalorder %s90, %s106
      %p108 = scmp.eq.s32.totalorder %s34, 0
      %p109 = por %p107, %p108
      %s110 = sadd.s32 %s36, 1
      %p111 = scmp.lt.s32.totalorder %s110, 2
      %s112 = scalar_select %p111, %s110, 2
      %s113 = sadd.s32 %s43, 1
      %p114 = scmp.lt.s32.totalorder %s113, 2
      %s115 = scalar_select %p114, %s113, 2
      %s116 = ssub.s32 %s35, %s47
      %s117 = ssub.s32 %s112, %s115
      %s118 = sor.u32 %s116, %s117
      %p119 = scmp.eq.s32.totalorder %s118, 0
      %s121 = sadd.s32 %s120, 1
      %s122 = scalar_select %p119, %s120, %s121
      %p125 = pneg %p119
      %p126 = scmp.eq.s32.totalorder %s28, 5
      %p127 = por %p125, %p126
      %p128 = scmp.ne.s32.totalorder %s120, %s123
      %p129 = scmp.eq.s32.totalorder %s28, 0
      %p130 = por %p128, %p129
      %p131 = scmp.ne.s32.totalorder %s120, %s123
      %p132 = scmp.eq.s32.totalorder %s33, 5
      %p133 = por %p131, %p132
      %p134 = scmp.ne.s32.totalorder %s123, %s124
      %p135 = scmp.eq.s32.totalorder %s33, 0
      %p136 = por %p134, %p135
      %p137 = scmp.ne.s32.totalorder %s123, %s124
      %p138 = scmp.eq.s32.totalorder %s34, 5
      %p139 = por %p137, %p138
      %p141 = scmp.ne.s32.totalorder %s124, %s140
      %p142 = scmp.eq.s32.totalorder %s34, 0
      %p143 = por %p141, %p142
      %s145 = sadd.s32 %s144, 1
      %p148 = scmp.eq.s32.totalorder %s28, 5
      %p149 = scmp.ne.s32.totalorder %s144, %s146
      %p150 = scmp.eq.s32.totalorder %s28, 0
      %p151 = por %p149, %p150
      %p152 = scmp.ne.s32.totalorder %s144, %s146
      %p153 = scmp.eq.s32.totalorder %s33, 5
      %p154 = por %p152, %p153
      %p155 = scmp.ne.s32.totalorder %s146, %s147
      %p156 = scmp.eq.s32.totalorder %s33, 0
      %p157 = por %p155, %p156
      %p158 = scmp.ne.s32.totalorder %s146, %s147
      %p159 = scmp.eq.s32.totalorder %s34, 5
      %p160 = por %p158, %p159
      %p162 = scmp.ne.s32.totalorder %s147, %s161
      %p163 = scmp.eq.s32.totalorder %s34, 0
      %p164 = por %p162, %p163
      %s166 = sadd.s32 %s165, 1
      %p169 = scmp.eq.s32.totalorder %s28, 5
      %p170 = scmp.ne.s32.totalorder %s165, %s167
      %p171 = scmp.eq.s32.totalorder %s28, 0
      %p172 = por %p170, %p171
      %p173 = scmp.ne.s32.totalorder %s165, %s167
      %p174 = scmp.eq.s32.totalorder %s33, 5
      %p175 = por %p173, %p174
      %p176 = scmp.ne.s32.totalorder %s167, %s168
      %p177 = scmp.eq.s32.totalorder %s33, 0
      %p178 = por %p176, %p177
      %p179 = scmp.ne.s32.totalorder %s167, %s168
      %p180 = scmp.eq.s32.totalorder %s34, 5
      %p181 = por %p179, %p180
      %p183 = scmp.ne.s32.totalorder %s168, %s182
      %p184 = scmp.eq.s32.totalorder %s34, 0
      %p185 = por %p183, %p184
      %s187 = sadd.s32 %s186, 1
      %p190 = scmp.eq.s32.totalorder %s28, 5
      %p191 = scmp.ne.s32.totalorder %s186, %s188
      %p192 = scmp.eq.s32.totalorder %s28, 0
      %p193 = por %p191, %p192
      %p194 = scmp.ne.s32.totalorder %s186, %s188
      %p195 = scmp.eq.s32.totalorder %s33, 5
      %p196 = por %p194, %p195
      %p197 = scmp.ne.s32.totalorder %s188, %s189
      %p198 = scmp.eq.s32.totalorder %s33, 0
      %p199 = por %p197, %p198
      %p200 = scmp.ne.s32.totalorder %s188, %s189
      %p201 = scmp.eq.s32.totalorder %s34, 5
      %p202 = por %p200, %p201
      %p204 = scmp.ne.s32.totalorder %s189, %s203
      %p205 = scmp.eq.s32.totalorder %s34, 0
      %p206 = por %p204, %p205
      %s208 = sadd.s32 %s207, 1
      %p211 = scmp.eq.s32.totalorder %s28, 5
      %p212 = scmp.ne.s32.totalorder %s207, %s209
      %p213 = scmp.eq.s32.totalorder %s28, 0
      %p214 = por %p212, %p213
      %p215 = scmp.ne.s32.totalorder %s207, %s209
      %p216 = scmp.eq.s32.totalorder %s33, 5
      %p217 = por %p215, %p216
      %p218 = scmp.ne.s32.totalorder %s209, %s210
      %p219 = scmp.eq.s32.totalorder %s33, 0
      %p220 = por %p218, %p219
      %p221 = scmp.ne.s32.totalorder %s209, %s210
      %p222 = scmp.eq.s32.totalorder %s34, 5
      %p223 = por %p221, %p222
      %p225 = scmp.ne.s32.totalorder %s210, %s224
      %p226 = scmp.eq.s32.totalorder %s34, 0
      %p227 = por %p225, %p226
      %s229 = sadd.s32 %s228, 1
      %p232 = scmp.eq.s32.totalorder %s28, 5
      %p233 = scmp.ne.s32.totalorder %s228, %s230
      %p234 = scmp.eq.s32.totalorder %s28, 0
      %p235 = por %p233, %p234
      %p236 = scmp.ne.s32.totalorder %s228, %s230
      %p237 = scmp.eq.s32.totalorder %s33, 5
      %p238 = por %p236, %p237
      %p239 = scmp.ne.s32.totalorder %s230, %s231
      %p240 = scmp.eq.s32.totalorder %s33, 0
      %p241 = por %p239, %p240
      %p242 = scmp.ne.s32.totalorder %s230, %s231
      %p243 = scmp.eq.s32.totalorder %s34, 5
      %p244 = por %p242, %p243
      %p246 = scmp.ne.s32.totalorder %s231, %s245
      %p247 = scmp.eq.s32.totalorder %s34, 0
      %p248 = por %p246, %p247
      %s250 = sadd.s32 %s249, 1
      %p253 = scmp.eq.s32.totalorder %s28, 5
      %p254 = scmp.ne.s32.totalorder %s249, %s251
      %p255 = scmp.eq.s32.totalorder %s28, 0
      %p256 = por %p254, %p255
      %p257 = scmp.ne.s32.totalorder %s249, %s251
      %p258 = scmp.eq.s32.totalorder %s33, 5
      %p259 = por %p257, %p258
      %p260 = scmp.ne.s32.totalorder %s251, %s252
      %p261 = scmp.eq.s32.totalorder %s33, 0
      %p262 = por %p260, %p261
      %p263 = scmp.ne.s32.totalorder %s251, %s252
      %p264 = scmp.eq.s32.totalorder %s34, 5
      %p265 = por %p263, %p264
      %p267 = scmp.ne.s32.totalorder %s252, %s266
      %p268 = scmp.eq.s32.totalorder %s34, 0
      %p269 = por %p267, %p268
      %s271 = sadd.s32 %s270, 1
      %p274 = scmp.eq.s32.totalorder %s28, 5
      %p275 = scmp.ne.s32.totalorder %s270, %s272
      %p276 = scmp.eq.s32.totalorder %s28, 0
      %p277 = por %p275, %p276
      %p278 = scmp.ne.s32.totalorder %s270, %s272
      %p279 = scmp.eq.s32.totalorder %s33, 5
      %p280 = por %p278, %p279
      %p281 = scmp.ne.s32.totalorder %s272, %s273
      %p282 = scmp.eq.s32.totalorder %s33, 0
      %p283 = por %p281, %p282
      %p284 = scmp.ne.s32.totalorder %s272, %s273
      %p285 = scmp.eq.s32.totalorder %s34, 5
      %p286 = por %p284, %p285
      %p288 = scmp.ne.s32.totalorder %s273, %s287
      %p289 = scmp.eq.s32.totalorder %s34, 0
      %p290 = por %p288, %p289
      %s292 = sadd.s32 %s291, 1
      %p295 = scmp.eq.s32.totalorder %s28, 5
      %p296 = scmp.ne.s32.totalorder %s291, %s293
      %p297 = scmp.eq.s32.totalorder %s28, 0
      %p298 = por %p296, %p297
      %p299 = scmp.ne.s32.totalorder %s291, %s293
      %p300 = scmp.eq.s32.totalorder %s33, 5
      %p301 = por %p299, %p300
      %p302 = scmp.ne.s32.totalorder %s293, %s294
      %p303 = scmp.eq.s32.totalorder %s33, 0
      %p304 = por %p302, %p303
      %p305 = scmp.ne.s32.totalorder %s293, %s294
      %p306 = scmp.eq.s32.totalorder %s34, 5
      %p307 = por %p305, %p306
      %p309 = scmp.ne.s32.totalorder %s294, %s308
      %p310 = scmp.eq.s32.totalorder %s34, 0
      %p311 = por %p309, %p310
      %s312 = ssub.s32 %s35, %s47
      %s313 = ssub.s32 %s36, %s43
      %s314 = sor.u32 %s312, %s313
      %p315 = scmp.eq.s32.totalorder %s314, 0
      %s317 = sadd.s32 %s316, 1
      %s318 = scalar_select %p315, %s316, %s317
      %p321 = pneg %p315
      %p322 = scmp.eq.s32.totalorder %s28, 5
      %p323 = por %p321, %p322
      %p324 = scmp.ne.s32.totalorder %s316, %s319
      %p325 = scmp.eq.s32.totalorder %s28, 0
      %p326 = por %p324, %p325
      %p327 = scmp.ne.s32.totalorder %s316, %s319
      %p328 = scmp.eq.s32.totalorder %s33, 5
      %p329 = por %p327, %p328
      %p330 = scmp.ne.s32.totalorder %s319, %s320
      %p331 = scmp.eq.s32.totalorder %s33, 0
      %p332 = por %p330, %p331
      %p333 = scmp.ne.s32.totalorder %s319, %s320
      %p334 = scmp.eq.s32.totalorder %s34, 5
      %p335 = por %p333, %p334
      %p337 = scmp.ne.s32.totalorder %s320, %s336
      %p338 = scmp.eq.s32.totalorder %s34, 0
      %p339 = por %p337, %p338
      %p340 = scmp.le.s32.totalorder 1, %s28
      %p341 = scmp.lt.s32.totalorder %s28, 7
      %p342 = pnand %p340, %p341
      %p343 = pneg %p342
      // Predicated region
      $region9: #{tpu_custom_call.1} parent=5 // pred_check
        _
      $region10: #{tpu_custom_call.1} parent=5 // pred_check_branch
        %345 = sbr.rel (%p342) target = $region12
      $region11: #{tpu_custom_call.1} parent=5 // pred_region
        %s346 = ssub.s32 %s28, 1
        // Predicated region
        $region13: #{tpu_custom_call.1} parent=11 // pred_check
          %p347 = pneg %p157
        $region14: #{tpu_custom_call.1} parent=11 // pred_check_branch
          %349 = sbr.rel (%p347) target = $region16
        $region15: #{tpu_custom_call.1} parent=11 // pred_region
          %s351 = ssub.s32 2048, 2048
          %352 = vsyncadd [#allocation9], %s351
          %s353 = sshll.u32 [#allocation8], 4
          %s354 = int_to_ptr.vmem [resolvable:$true] %s353
          %359 = dma.hbm_to_vmem [thread:$0]  %s3, 2048, %s354, [#allocation9], 128, 128, 8
        $region16: #{tpu_custom_call.1} parent=11 // pred_fallthru
          _
        // Predicated region
        $region17: #{tpu_custom_call.1} parent=11 // pred_check
          %p360 = pneg %p178
        $region18: #{tpu_custom_call.1} parent=11 // pred_check_branch
          %362 = sbr.rel (%p360) target = $region20
        $region19: #{tpu_custom_call.1} parent=11 // pred_region
          _
        $region20: #{tpu_custom_call.1} parent=11 // pred_fallthru
          _
        // Predicated region
        $region21: #{tpu_custom_call.1} parent=11 // pred_check
          %p363 = pneg %p199
        $region22: #{tpu_custom_call.1} parent=11 // pred_check_branch
          %365 = sbr.rel (%p363) target = $region24
        $region23: #{tpu_custom_call.1} parent=11 // pred_region
          %s367 = ssub.s32 6144, 6144
          %368 = vsyncadd [#allocation9], %s367
          %s369 = sshll.u32 [#allocation10], 4
          %s370 = int_to_ptr.vmem [resolvable:$true] %s369
          %375 = dma.hbm_to_vmem [thread:$0]  %s5, 6144, %s370, [#allocation9], 128, 128, 8
        $region24: #{tpu_custom_call.1} parent=11 // pred_fallthru
          _
        // Predicated region
        $region25: #{tpu_custom_call.1} parent=11 // pred_check
          %p376 = pneg %p220
        $region26: #{tpu_custom_call.1} parent=11 // pred_check_branch
          %378 = sbr.rel (%p376) target = $region28
        $region27: #{tpu_custom_call.1} parent=11 // pred_region
          _
        $region28: #{tpu_custom_call.1} parent=11 // pred_fallthru
          _
        // Predicated region
        $region29: #{tpu_custom_call.1} parent=11 // pred_check
          %p379 = pneg %p241
        $region30: #{tpu_custom_call.1} parent=11 // pred_check_branch
          %381 = sbr.rel (%p379) target = $region32
        $region31: #{tpu_custom_call.1} parent=11 // pred_region
          %s383 = ssub.s32 2048, 2048
          %384 = vsyncadd [#allocation12], %s383
          %s385 = sshll.u32 [#allocation11], 4
          %s386 = int_to_ptr.vmem [resolvable:$true] %s385
          %391 = dma.hbm_to_vmem [thread:$0]  %s7, 2048, %s386, [#allocation12], 128, 128, 8
        $region32: #{tpu_custom_call.1} parent=11 // pred_fallthru
          _
        // Predicated region
        $region33: #{tpu_custom_call.1} parent=11 // pred_check
          %p392 = pneg %p262
        $region34: #{tpu_custom_call.1} parent=11 // pred_check_branch
          %394 = sbr.rel (%p392) target = $region36
        $region35: #{tpu_custom_call.1} parent=11 // pred_region
          _
        $region36: #{tpu_custom_call.1} parent=11 // pred_fallthru
          _
        // Predicated region
        $region37: #{tpu_custom_call.1} parent=11 // pred_check
          %p395 = pneg %p283
        $region38: #{tpu_custom_call.1} parent=11 // pred_check_branch
          %397 = sbr.rel (%p395) target = $region40
        $region39: #{tpu_custom_call.1} parent=11 // pred_region
          %s399 = ssub.s32 2048, 2048
          %400 = vsyncadd [#allocation12], %s399
          %s401 = sshll.u32 [#allocation13], 4
          %s402 = int_to_ptr.vmem [resolvable:$true] %s401
          %407 = dma.hbm_to_vmem [thread:$0]  %s9, 2048, %s402, [#allocation12], 128, 128, 8
        $region40: #{tpu_custom_call.1} parent=11 // pred_fallthru
          _
        // Predicated region
        $region41: #{tpu_custom_call.1} parent=11 // pred_check
          %p408 = pneg %p304
        $region42: #{tpu_custom_call.1} parent=11 // pred_check_branch
          %410 = sbr.rel (%p408) target = $region44
        $region43: #{tpu_custom_call.1} parent=11 // pred_region
          _
        $region44: #{tpu_custom_call.1} parent=11 // pred_fallthru
          _
      $region12: #{tpu_custom_call.1} parent=5 // pred_fallthru
        _
      %p411 = scmp.lt.s32.totalorder %s28, 6
      // Predicated region
      $region45: #{tpu_custom_call.1} parent=5 // pred_check
        %p412 = pneg %p411
      $region46: #{tpu_custom_call.1} parent=5 // pred_check_branch
        %414 = sbr.rel (%p412) target = $region48
      $region47: #{tpu_custom_call.1} parent=5 // pred_region
        // Predicated region
        $region49: #{tpu_custom_call.1} parent=47 // pred_check
          %p415 = pneg %p62
        $region50: #{tpu_custom_call.1} parent=47 // pred_check_branch
          %417 = sbr.rel (%p415) target = $region52
        $region51: #{tpu_custom_call.1} parent=47 // pred_region
          %s418 = sand.u32 %s52, 1
          %s419 = scalar_lea.sflag [#allocation3], %s418
          %s420 = sand.u32 %s52, 1
          %s421 = smul.addr %s420, 8
          %s422 = scalar_lea.vmem [#allocation2], %s421
          %s424 = ssub.s32 128, 128
          %425 = vsyncadd %s419, %s424
          %s426 = smul.addr %s35, 3
          %s427 = sadd.s32 %s36, %s426
          %s428 = smul.addr %s427, 128
          %s429 = scalar_lea.hbm %s0, %s428
          %s431 = sshll.u32 %s422, 4
          %s432 = int_to_ptr.vmem [resolvable:$true] %s431
          %434 = dma.hbm_to_vmem [thread:$0]  %s429, 128, %s432, %s419
        $region52: #{tpu_custom_call.1} parent=47 // pred_fallthru
          _
        // Predicated region
        $region53: #{tpu_custom_call.1} parent=47 // pred_check
          %p435 = pneg %p96
        $region54: #{tpu_custom_call.1} parent=47 // pred_check_branch
          %437 = sbr.rel (%p435) target = $region56
        $region55: #{tpu_custom_call.1} parent=47 // pred_region
          %s438 = sand.u32 %s28, 1
          %s439 = scalar_lea.sflag [#allocation6], %s438
          %s440 = sand.u32 %s86, 1
          %s441 = smul.addr %s440, 8
          %s442 = scalar_lea.vmem [#allocation5], %s441
          %s443 = ssub.s32 %s36, 1
          %p444 = scmp.gt.s32.totalorder %s443, 0
          %s445 = scalar_select %p444, %s443, 0
          %s447 = ssub.s32 128, 128
          %448 = vsyncadd %s439, %s447
          %s449 = smul.addr %s35, 3
          %s450 = sadd.s32 %s445, %s449
          %s451 = smul.addr %s450, 128
          %s452 = scalar_lea.hbm %s1, %s451
          %s454 = sshll.u32 %s442, 4
          %s455 = int_to_ptr.vmem [resolvable:$true] %s454
          %457 = dma.hbm_to_vmem [thread:$0]  %s452, 128, %s455, %s439
        $region56: #{tpu_custom_call.1} parent=47 // pred_fallthru
          _
        // Predicated region
        $region57: #{tpu_custom_call.1} parent=47 // pred_check
          %p458 = pneg %p130
        $region58: #{tpu_custom_call.1} parent=47 // pred_check_branch
          %460 = sbr.rel (%p458) target = $region60
        $region59: #{tpu_custom_call.1} parent=47 // pred_region
          %s461 = sand.u32 %s28, 1
          %s462 = scalar_lea.sflag [#allocation6], %s461
          %s463 = sand.u32 %s120, 1
          %s464 = smul.addr %s463, 8
          %s465 = scalar_lea.vmem [#allocation7], %s464
          %s466 = sadd.s32 %s36, 1
          %p467 = scmp.lt.s32.totalorder %s466, 2
          %s468 = scalar_select %p467, %s466, 2
          %s470 = ssub.s32 128, 128
          %471 = vsyncadd %s462, %s470
          %s472 = smul.addr %s35, 3
          %s473 = sadd.s32 %s468, %s472
          %s474 = smul.addr %s473, 128
          %s475 = scalar_lea.hbm %s2, %s474
          %s477 = sshll.u32 %s465, 4
          %s478 = int_to_ptr.vmem [resolvable:$true] %s477
          %480 = dma.hbm_to_vmem [thread:$0]  %s475, 128, %s478, %s462
        $region60: #{tpu_custom_call.1} parent=47 // pred_fallthru
          _
      $region48: #{tpu_custom_call.1} parent=5 // pred_fallthru
        _
      %p481 = scmp.le.s32.totalorder 1, %s28
      %p482 = scmp.lt.s32.totalorder %s28, 7
      %p483 = pnand %p481, %p482
      %p484 = pneg %p483
      // Predicated region
      $region61: #{tpu_custom_call.1} parent=5 // pred_check
        _
      $region62: #{tpu_custom_call.1} parent=5 // pred_check_branch
        %486 = sbr.rel (%p483) target = $region64
      $region63: #{tpu_custom_call.1} parent=5 // pred_region
        %s487 = ssub.s32 %s28, 1
        %s488 = sand.u32 %s55, 1
        %s489 = scalar_lea.sflag [#allocation3], %s488
        %s490 = sand.u32 %s55, 1
        %s491 = smul.addr %s490, 8
        %s492 = scalar_lea.vmem [#allocation2], %s491
        // Predicated region
        $region65: #{tpu_custom_call.1} parent=63 // pred_check
          %p493 = pneg %p68
        $region66: #{tpu_custom_call.1} parent=63 // pred_check_branch
          %495 = sbr.rel (%p493) target = $region68
        $region67: #{tpu_custom_call.1} parent=63 // pred_region
          %496 = dma.done %s489, 128
        $region68: #{tpu_custom_call.1} parent=63 // pred_fallthru
          _
        %s497 = sand.u32 %s33, 1
        %s498 = scalar_lea.sflag [#allocation6], %s497
        %s499 = sand.u32 %s89, 1
        %s500 = smul.addr %s499, 8
        %s501 = scalar_lea.vmem [#allocation5], %s500
        // Predicated region
        $region69: #{tpu_custom_call.1} parent=63 // pred_check
          %p502 = pneg %p102
        $region70: #{tpu_custom_call.1} parent=63 // pred_check_branch
          %504 = sbr.rel (%p502) target = $region72
        $region71: #{tpu_custom_call.1} parent=63 // pred_region
          %505 = dma.done %s498, 128
        $region72: #{tpu_custom_call.1} parent=63 // pred_fallthru
          _
        %s506 = sand.u32 %s33, 1
        %s507 = scalar_lea.sflag [#allocation6], %s506
        %s508 = sand.u32 %s123, 1
        %s509 = smul.addr %s508, 8
        %s510 = scalar_lea.vmem [#allocation7], %s509
        // Predicated region
        $region73: #{tpu_custom_call.1} parent=63 // pred_check
          %p511 = pneg %p136
        $region74: #{tpu_custom_call.1} parent=63 // pred_check_branch
          %513 = sbr.rel (%p511) target = $region76
        $region75: #{tpu_custom_call.1} parent=63 // pred_region
          %514 = dma.done %s507, 128
        $region76: #{tpu_custom_call.1} parent=63 // pred_fallthru
          _
        // Predicated region
        $region77: #{tpu_custom_call.1} parent=63 // pred_check
          %p515 = pneg %p157
        $region78: #{tpu_custom_call.1} parent=63 // pred_check_branch
          %517 = sbr.rel (%p515) target = $region80
        $region79: #{tpu_custom_call.1} parent=63 // pred_region
          %518 = dma.done [#allocation9], 2048
        $region80: #{tpu_custom_call.1} parent=63 // pred_fallthru
          _
        // Predicated region
        $region81: #{tpu_custom_call.1} parent=63 // pred_check
          %p519 = pneg %p199
        $region82: #{tpu_custom_call.1} parent=63 // pred_check_branch
          %521 = sbr.rel (%p519) target = $region84
        $region83: #{tpu_custom_call.1} parent=63 // pred_region
          %522 = dma.done [#allocation9], 6144
        $region84: #{tpu_custom_call.1} parent=63 // pred_fallthru
          _
        // Predicated region
        $region85: #{tpu_custom_call.1} parent=63 // pred_check
          %p523 = pneg %p241
        $region86: #{tpu_custom_call.1} parent=63 // pred_check_branch
          %525 = sbr.rel (%p523) target = $region88
        $region87: #{tpu_custom_call.1} parent=63 // pred_region
          %526 = dma.done [#allocation12], 2048
        $region88: #{tpu_custom_call.1} parent=63 // pred_fallthru
          _
        // Predicated region
        $region89: #{tpu_custom_call.1} parent=63 // pred_check
          %p527 = pneg %p283
        $region90: #{tpu_custom_call.1} parent=63 // pred_check_branch
          %529 = sbr.rel (%p527) target = $region92
        $region91: #{tpu_custom_call.1} parent=63 // pred_region
          %530 = dma.done [#allocation12], 2048
        $region92: #{tpu_custom_call.1} parent=63 // pred_fallthru
          _
        %s531 = sand.u32 %s55, 1
        %s532 = scalar_lea.sflag [#allocation3], %s531
        %s533 = sand.u32 %s55, 1
        %s534 = smul.addr %s533, 8
        %s535 = scalar_lea.vmem [#allocation2], %s534
        %p536 = pneg %p68
        %p537 = pneg %p65
        %s538 = sand.u32 %s33, 1
        %s539 = scalar_lea.sflag [#allocation6], %s538
        %s540 = sand.u32 %s89, 1
        %s541 = smul.addr %s540, 8
        %s542 = scalar_lea.vmem [#allocation5], %s541
        %p543 = pneg %p102
        %p544 = pneg %p99
        %s545 = sand.u32 %s33, 1
        %s546 = scalar_lea.sflag [#allocation6], %s545
        %s547 = sand.u32 %s123, 1
        %s548 = smul.addr %s547, 8
        %s549 = scalar_lea.vmem [#allocation7], %s548
        %p550 = pneg %p136
        %p551 = pneg %p133
        %p552 = pneg %p157
        %p553 = pneg %p154
        %p554 = pneg %p178
        %p555 = pneg %p175
        %p556 = pneg %p199
        %p557 = pneg %p196
        %p558 = pneg %p220
        %p559 = pneg %p217
        %p560 = pneg %p241
        %p561 = pneg %p238
        %p562 = pneg %p262
        %p563 = pneg %p259
        %p564 = pneg %p283
        %p565 = pneg %p280
        %p566 = pneg %p304
        %p567 = pneg %p301
        %p568 = pneg %p332
        %p569 = pneg %p329
        %s570 = sand.u32 %s319, 1
        %s571 = scalar_lea.sflag [#allocation4], %s570
        %s572 = sand.u32 %s319, 1
        %s573 = smul.addr %s572, 8
        %s574 = scalar_lea.vmem [#allocation14], %s573
        %s575 = ssub.s32 %s38, 1
        %p576 = scmp.gt.s32.totalorder %s575, 0
        %s577 = scalar_select %p576, %s575, 0
        %s578 = sadd.s32 %s38, 1
        %p579 = scmp.lt.s32.totalorder %s578, 2
        %s580 = scalar_select %p579, %s578, 2
        %v581 = vld [vmem:[%s492] sm:$0xff]
        %v582 = vld [vmem:[#allocation8] sm:$0xff]
        %v583 = vld [vmem:[#allocation8 + $0x8] sm:$0xff]
        %v584 = vld [vmem:[#allocation8 + $0x10] sm:$0xff]
        %v585 = vld [vmem:[#allocation8 + $0x18] sm:$0xff]
        %v586 = vld [vmem:[#allocation8 + $0x20] sm:$0xff]
        %v587 = vld [vmem:[#allocation8 + $0x28] sm:$0xff]
        %v588 = vld [vmem:[#allocation8 + $0x30] sm:$0xff]
        %v589 = vld [vmem:[#allocation8 + $0x38] sm:$0xff]
        %v590 = vld [vmem:[#allocation8 + $0x40] sm:$0xff]
        %v591 = vld [vmem:[#allocation8 + $0x48] sm:$0xff]
        %v592 = vld [vmem:[#allocation8 + $0x50] sm:$0xff]
        %v593 = vld [vmem:[#allocation8 + $0x58] sm:$0xff]
        %v594 = vld [vmem:[#allocation8 + $0x60] sm:$0xff]
        %v595 = vld [vmem:[#allocation8 + $0x68] sm:$0xff]
        %v596 = vld [vmem:[#allocation8 + $0x70] sm:$0xff]
        %v597 = vld [vmem:[#allocation8 + $0x78] sm:$0xff]
        %v598 = vld [vmem:[%s4] sm:$0x1]
        %v599 = vld [vmem:[#allocation13] sm:$0xff]
        %v600 = vld [vmem:[#allocation13 + $0x8] sm:$0xff]
        %v601 = vld [vmem:[#allocation13 + $0x10] sm:$0xff]
        %v602 = vld [vmem:[#allocation13 + $0x18] sm:$0xff]
        %v603 = vld [vmem:[#allocation13 + $0x20] sm:$0xff]
        %v604 = vld [vmem:[#allocation13 + $0x28] sm:$0xff]
        %v605 = vld [vmem:[#allocation13 + $0x30] sm:$0xff]
        %v606 = vld [vmem:[#allocation13 + $0x38] sm:$0xff]
        %v607 = vld [vmem:[#allocation13 + $0x40] sm:$0xff]
        %v608 = vld [vmem:[#allocation13 + $0x48] sm:$0xff]
        %v609 = vld [vmem:[#allocation13 + $0x50] sm:$0xff]
        %v610 = vld [vmem:[#allocation13 + $0x58] sm:$0xff]
        %v611 = vld [vmem:[#allocation13 + $0x60] sm:$0xff]
        %v612 = vld [vmem:[#allocation13 + $0x68] sm:$0xff]
        %v613 = vld [vmem:[#allocation13 + $0x70] sm:$0xff]
        %v614 = vld [vmem:[#allocation13 + $0x78] sm:$0xff]
        %v615 = vld [vmem:[%s10] sm:$0x1]
        %v617 = vlaneseq
        %v618 = vshrl.u32 %v617, 7
        %v619 = vsub.s32 0, %v618
        %v620 = vrot.slane %v615, %v619
        %622 = vmatprep.subr.mxu0 0.0
        %623 = vmatpush1.msra.mxu0 %v614
        %624 = vmatprep.subr.mxu0 0.0
        %625 = vmatpush1.msra.mxu0 %v613
        %626 = vmatprep.subr.mxu0 0.0
        %627 = vmatpush1.msra.mxu0 %v612
        %628 = vmatprep.subr.mxu0 0.0
        %629 = vmatpush1.msra.mxu0 %v611
        %630 = vmatprep.subr.mxu0 0.0
        %631 = vmatpush1.msra.mxu0 %v610
        %632 = vmatprep.subr.mxu0 0.0
        %633 = vmatpush1.msra.mxu0 %v609
        %634 = vmatprep.subr.mxu0 0.0
        %635 = vmatpush1.msra.mxu0 %v608
        %636 = vmatprep.subr.mxu0 0.0
        %637 = vmatpush1.msra.mxu0 %v607
        %638 = vmatprep.subr.mxu0 0.0
        %639 = vmatpush1.msra.mxu0 %v606
        %640 = vmatprep.subr.mxu0 0.0
        %641 = vmatpush1.msra.mxu0 %v605
        %642 = vmatprep.subr.mxu0 0.0
        %643 = vmatpush1.msra.mxu0 %v604
        %644 = vmatprep.subr.mxu0 0.0
        %645 = vmatpush1.msra.mxu0 %v603
        %646 = vmatprep.subr.mxu0 0.0
        %647 = vmatpush1.msra.mxu0 %v602
        %648 = vmatprep.subr.mxu0 0.0
        %649 = vmatpush1.msra.mxu0 %v601
        %650 = vmatprep.subr.mxu0 0.0
        %651 = vmatpush1.msra.mxu0 %v600
        %652 = vmatprep.subr.mxu0 0.0
        %653 = vmatpush1.msra.mxu0 %v599
        %654 = vmatprep.subr.mxu0 0.0
        %655 = vmatpush2.msra.mxu0 0.0
        %656 = vmatprep.subr.mxu0 0.0
        %657 = vmatpush2.msra.mxu0 0.0
        %658 = vmatprep.subr.mxu0 0.0
        %659 = vmatpush2.msra.mxu0 0.0
        %660 = vmatprep.subr.mxu0 0.0
        %661 = vmatpush2.msra.mxu0 0.0
        %662 = vmatprep.subr.mxu0 0.0
        %663 = vmatpush2.msra.mxu0 0.0
        %664 = vmatprep.subr.mxu0 0.0
        %665 = vmatpush2.msra.mxu0 0.0
        %666 = vmatprep.subr.mxu0 0.0
        %667 = vmatpush2.msra.mxu0 0.0
        %668 = vmatprep.subr.mxu0 0.0
        %669 = vmatpush2.msra.mxu0 0.0
        %670 = vmatprep.subr.mxu0 0.0
        %671 = vmatpush2.msra.mxu0 0.0
        %672 = vmatprep.subr.mxu0 0.0
        %673 = vmatpush2.msra.mxu0 0.0
        %674 = vmatprep.subr.mxu0 0.0
        %675 = vmatpush2.msra.mxu0 0.0
        %676 = vmatprep.subr.mxu0 0.0
        %677 = vmatpush2.msra.mxu0 0.0
        %678 = vmatprep.subr.mxu0 0.0
        %679 = vmatpush2.msra.mxu0 0.0
        %680 = vmatprep.subr.mxu0 0.0
        %681 = vmatpush2.msra.mxu0 0.0
        %682 = vmatprep.subr.mxu0 0.0
        %683 = vmatpush2.msra.mxu0 0.0
        %684 = vmatprep.subr.mxu0 0.0
        %685 = vmatpush2.msra.mxu0 0.0
        %686 = vmatprep.mubr.f32.mxu0 0.0
        %687 = vmatmul.mubr.f32.gmra.mxu0 %v581
        %v688 = vpop.f32.mrf.mxu0
        %v689 = vadd.f32 %v620, %v688
        %v690 = vpop.f32.mrf.mxu0
        %691 = vdwg.mxu0
        %v693 = vlaneseq
        %v694 = vshrl.u32 %v693, 7
        %v695 = vsub.s32 0, %v694
        %v696 = vrot.slane %v598, %v695
        %698 = vmatprep.subr.mxu0 0.0
        %699 = vmatpush1.msra.mxu0 %v597
        %700 = vmatprep.subr.mxu0 0.0
        %701 = vmatpush1.msra.mxu0 %v596
        %702 = vmatprep.subr.mxu0 0.0
        %703 = vmatpush1.msra.mxu0 %v595
        %704 = vmatprep.subr.mxu0 0.0
        %705 = vmatpush1.msra.mxu0 %v594
        %706 = vmatprep.subr.mxu0 0.0
        %707 = vmatpush1.msra.mxu0 %v593
        %708 = vmatprep.subr.mxu0 0.0
        %709 = vmatpush1.msra.mxu0 %v592
        %710 = vmatprep.subr.mxu0 0.0
        %711 = vmatpush1.msra.mxu0 %v591
        %712 = vmatprep.subr.mxu0 0.0
        %713 = vmatpush1.msra.mxu0 %v590
        %714 = vmatprep.subr.mxu0 0.0
        %715 = vmatpush1.msra.mxu0 %v589
        %716 = vmatprep.subr.mxu0 0.0
        %717 = vmatpush1.msra.mxu0 %v588
        %718 = vmatprep.subr.mxu0 0.0
        %719 = vmatpush1.msra.mxu0 %v587
        %720 = vmatprep.subr.mxu0 0.0
        %721 = vmatpush1.msra.mxu0 %v586
        %722 = vmatprep.subr.mxu0 0.0
        %723 = vmatpush1.msra.mxu0 %v585
        %724 = vmatprep.subr.mxu0 0.0
        %725 = vmatpush1.msra.mxu0 %v584
        %726 = vmatprep.subr.mxu0 0.0
        %727 = vmatpush1.msra.mxu0 %v583
        %728 = vmatprep.subr.mxu0 0.0
        %729 = vmatpush1.msra.mxu0 %v582
        %730 = vmatprep.subr.mxu0 0.0
        %731 = vmatpush2.msra.mxu0 0.0
        %732 = vmatprep.subr.mxu0 0.0
        %733 = vmatpush2.msra.mxu0 0.0
        %734 = vmatprep.subr.mxu0 0.0
        %735 = vmatpush2.msra.mxu0 0.0
        %736 = vmatprep.subr.mxu0 0.0
        %737 = vmatpush2.msra.mxu0 0.0
        %738 = vmatprep.subr.mxu0 0.0
        %739 = vmatpush2.msra.mxu0 0.0
        %740 = vmatprep.subr.mxu0 0.0
        %741 = vmatpush2.msra.mxu0 0.0
        %742 = vmatprep.subr.mxu0 0.0
        %743 = vmatpush2.msra.mxu0 0.0
        %744 = vmatprep.subr.mxu0 0.0
        %745 = vmatpush2.msra.mxu0 0.0
        %746 = vmatprep.subr.mxu0 0.0
        %747 = vmatpush2.msra.mxu0 0.0
        %748 = vmatprep.subr.mxu0 0.0
        %749 = vmatpush2.msra.mxu0 0.0
        %750 = vmatprep.subr.mxu0 0.0
        %751 = vmatpush2.msra.mxu0 0.0
        %752 = vmatprep.subr.mxu0 0.0
        %753 = vmatpush2.msra.mxu0 0.0
        %754 = vmatprep.subr.mxu0 0.0
        %755 = vmatpush2.msra.mxu0 0.0
        %756 = vmatprep.subr.mxu0 0.0
        %757 = vmatpush2.msra.mxu0 0.0
        %758 = vmatprep.subr.mxu0 0.0
        %759 = vmatpush2.msra.mxu0 0.0
        %760 = vmatprep.subr.mxu0 0.0
        %761 = vmatpush2.msra.mxu0 0.0
        %762 = vmatprep.mubr.f32.mxu0 0.0
        %763 = vmatmul.mubr.f32.gmra.mxu0 %v581
        %v764 = vpop.f32.mrf.mxu0
        %v765 = vadd.f32 %v696, %v764
        %v766 = vpop.f32.mrf.mxu0
        %767 = vdwg.mxu0
        %vm768 = vcmp.ge.f32.partialorder %v765, 0.0
        %v769 = vmul.f32 %v765, 0.1
        %v770 = vsel %vm768, %v765, %v769
        %v771 = vld [vmem:[%s501] sm:$0xff]
        %772 = vmatprep.subr.mxu0 0.0
        %773 = vmatpush1.msra.mxu0 %v597
        %774 = vmatprep.subr.mxu0 0.0
        %775 = vmatpush1.msra.mxu0 %v596
        %776 = vmatprep.subr.mxu0 0.0
        %777 = vmatpush1.msra.mxu0 %v595
        %778 = vmatprep.subr.mxu0 0.0
        %779 = vmatpush1.msra.mxu0 %v594
        %780 = vmatprep.subr.mxu0 0.0
        %781 = vmatpush1.msra.mxu0 %v593
        %782 = vmatprep.subr.mxu0 0.0
        %783 = vmatpush1.msra.mxu0 %v592
        %784 = vmatprep.subr.mxu0 0.0
        %785 = vmatpush1.msra.mxu0 %v591
        %786 = vmatprep.subr.mxu0 0.0
        %787 = vmatpush1.msra.mxu0 %v590
        %788 = vmatprep.subr.mxu0 0.0
        %789 = vmatpush1.msra.mxu0 %v589
        %790 = vmatprep.subr.mxu0 0.0
        %791 = vmatpush1.msra.mxu0 %v588
        %792 = vmatprep.subr.mxu0 0.0
        %793 = vmatpush1.msra.mxu0 %v587
        %794 = vmatprep.subr.mxu0 0.0
        %795 = vmatpush1.msra.mxu0 %v586
        %796 = vmatprep.subr.mxu0 0.0
        %797 = vmatpush1.msra.mxu0 %v585
        %798 = vmatprep.subr.mxu0 0.0
        %799 = vmatpush1.msra.mxu0 %v584
        %800 = vmatprep.subr.mxu0 0.0
        %801 = vmatpush1.msra.mxu0 %v583
        %802 = vmatprep.subr.mxu0 0.0
        %803 = vmatpush1.msra.mxu0 %v582
        %804 = vmatprep.subr.mxu0 0.0
        %805 = vmatpush2.msra.mxu0 0.0
        %806 = vmatprep.subr.mxu0 0.0
        %807 = vmatpush2.msra.mxu0 0.0
        %808 = vmatprep.subr.mxu0 0.0
        %809 = vmatpush2.msra.mxu0 0.0
        %810 = vmatprep.subr.mxu0 0.0
        %811 = vmatpush2.msra.mxu0 0.0
        %812 = vmatprep.subr.mxu0 0.0
        %813 = vmatpush2.msra.mxu0 0.0
        %814 = vmatprep.subr.mxu0 0.0
        %815 = vmatpush2.msra.mxu0 0.0
        %816 = vmatprep.subr.mxu0 0.0
        %817 = vmatpush2.msra.mxu0 0.0
        %818 = vmatprep.subr.mxu0 0.0
        %819 = vmatpush2.msra.mxu0 0.0
        %820 = vmatprep.subr.mxu0 0.0
        %821 = vmatpush2.msra.mxu0 0.0
        %822 = vmatprep.subr.mxu0 0.0
        %823 = vmatpush2.msra.mxu0 0.0
        %824 = vmatprep.subr.mxu0 0.0
        %825 = vmatpush2.msra.mxu0 0.0
        %826 = vmatprep.subr.mxu0 0.0
        %827 = vmatpush2.msra.mxu0 0.0
        %828 = vmatprep.subr.mxu0 0.0
        %829 = vmatpush2.msra.mxu0 0.0
        %830 = vmatprep.subr.mxu0 0.0
        %831 = vmatpush2.msra.mxu0 0.0
        %832 = vmatprep.subr.mxu0 0.0
        %833 = vmatpush2.msra.mxu0 0.0
        %834 = vmatprep.subr.mxu0 0.0
        %835 = vmatpush2.msra.mxu0 0.0
        %836 = vmatprep.mubr.f32.mxu0 0.0
        %837 = vmatmul.mubr.f32.gmra.mxu0 %v771
        %v838 = vpop.f32.mrf.mxu0
        %v839 = vadd.f32 %v696, %v838
        %v840 = vpop.f32.mrf.mxu0
        %841 = vdwg.mxu0
        %vm842 = vcmp.ge.f32.partialorder %v839, 0.0
        %v843 = vmul.f32 %v839, 0.1
        %v844 = vsel %vm842, %v839, %v843
        %v845 = vld [vmem:[%s510] sm:$0xff]
        %846 = vmatprep.subr.mxu0 0.0
        %847 = vmatpush1.msra.mxu0 %v597
        %848 = vmatprep.subr.mxu0 0.0
        %849 = vmatpush1.msra.mxu0 %v596
        %850 = vmatprep.subr.mxu0 0.0
        %851 = vmatpush1.msra.mxu0 %v595
        %852 = vmatprep.subr.mxu0 0.0
        %853 = vmatpush1.msra.mxu0 %v594
        %854 = vmatprep.subr.mxu0 0.0
        %855 = vmatpush1.msra.mxu0 %v593
        %856 = vmatprep.subr.mxu0 0.0
        %857 = vmatpush1.msra.mxu0 %v592
        %858 = vmatprep.subr.mxu0 0.0
        %859 = vmatpush1.msra.mxu0 %v591
        %860 = vmatprep.subr.mxu0 0.0
        %861 = vmatpush1.msra.mxu0 %v590
        %862 = vmatprep.subr.mxu0 0.0
        %863 = vmatpush1.msra.mxu0 %v589
        %864 = vmatprep.subr.mxu0 0.0
        %865 = vmatpush1.msra.mxu0 %v588
        %866 = vmatprep.subr.mxu0 0.0
        %867 = vmatpush1.msra.mxu0 %v587
        %868 = vmatprep.subr.mxu0 0.0
        %869 = vmatpush1.msra.mxu0 %v586
        %870 = vmatprep.subr.mxu0 0.0
        %871 = vmatpush1.msra.mxu0 %v585
        %872 = vmatprep.subr.mxu0 0.0
        %873 = vmatpush1.msra.mxu0 %v584
        %874 = vmatprep.subr.mxu0 0.0
        %875 = vmatpush1.msra.mxu0 %v583
        %876 = vmatprep.subr.mxu0 0.0
        %877 = vmatpush1.msra.mxu0 %v582
        %878 = vmatprep.subr.mxu0 0.0
        %879 = vmatpush2.msra.mxu0 0.0
        %880 = vmatprep.subr.mxu0 0.0
        %881 = vmatpush2.msra.mxu0 0.0
        %882 = vmatprep.subr.mxu0 0.0
        %883 = vmatpush2.msra.mxu0 0.0
        %884 = vmatprep.subr.mxu0 0.0
        %885 = vmatpush2.msra.mxu0 0.0
        %886 = vmatprep.subr.mxu0 0.0
        %887 = vmatpush2.msra.mxu0 0.0
        %888 = vmatprep.subr.mxu0 0.0
        %889 = vmatpush2.msra.mxu0 0.0
        %890 = vmatprep.subr.mxu0 0.0
        %891 = vmatpush2.msra.mxu0 0.0
        %892 = vmatprep.subr.mxu0 0.0
        %893 = vmatpush2.msra.mxu0 0.0
        %894 = vmatprep.subr.mxu0 0.0
        %895 = vmatpush2.msra.mxu0 0.0
        %896 = vmatprep.subr.mxu0 0.0
        %897 = vmatpush2.msra.mxu0 0.0
        %898 = vmatprep.subr.mxu0 0.0
        %899 = vmatpush2.msra.mxu0 0.0
        %900 = vmatprep.subr.mxu0 0.0
        %901 = vmatpush2.msra.mxu0 0.0
        %902 = vmatprep.subr.mxu0 0.0
        %903 = vmatpush2.msra.mxu0 0.0
        %904 = vmatprep.subr.mxu0 0.0
        %905 = vmatpush2.msra.mxu0 0.0
        %906 = vmatprep.subr.mxu0 0.0
        %907 = vmatpush2.msra.mxu0 0.0
        %908 = vmatprep.subr.mxu0 0.0
        %909 = vmatpush2.msra.mxu0 0.0
        %910 = vmatprep.mubr.f32.mxu0 0.0
        %911 = vmatmul.mubr.f32.gmra.mxu0 %v845
        %v912 = vpop.f32.mrf.mxu0
        %v913 = vadd.f32 %v696, %v912
        %v914 = vpop.f32.mrf.mxu0
        %915 = vdwg.mxu0
        %vm916 = vcmp.ge.f32.partialorder %v913, 0.0
        %v917 = vmul.f32 %v913, 0.1
        %v918 = vsel %vm916, %v913, %v917
        %v919 = vlaneseq
        %v920 = vshrl.u32 %v919, 7
        %s921 = smul.u32 %s38, 8
        %v922 = vstv %s921
        %v923 = vadd.s32 %v920, %v922
        %v924 = vrot.slane %v770, 7
        %vm925 = vcmp.eq.s32.totalorder %v920, 0
        %v926 = vlaneseq
        %v927 = vshrl.u32 %v926, 7
        %v928 = vsub.s32 7, %v927
        %v929 = vrot.slane %v844, %v928
        %v930 = vsel %vm925, %v929, %v924
        %vm931 = vcmp.eq.s32.totalorder %v923, 0
        %v932 = vsel %vm931, 0.0, %v930
        %v933 = vrot.slane %v770, 1
        %vm934 = vcmp.eq.s32.totalorder %v920, 7
        %v935 = vlaneseq
        %v936 = vshrl.u32 %v935, 7
        %v937 = vsub.s32 0, %v936
        %v938 = vrot.slane %v918, %v937
        %v939 = vsel %vm934, %v938, %v933
        %vm940 = vcmp.ge.s32.totalorder %v923, 23
        %v941 = vsel %vm940, 0.0, %v939
        %v942 = vld [vmem:[#allocation10] sm:$0xff]
        %v943 = vld [vmem:[#allocation10 + $0x8] sm:$0xff]
        %v944 = vld [vmem:[#allocation10 + $0x10] sm:$0xff]
        %v945 = vld [vmem:[#allocation10 + $0x18] sm:$0xff]
        %v946 = vld [vmem:[#allocation10 + $0x20] sm:$0xff]
        %v947 = vld [vmem:[#allocation10 + $0x28] sm:$0xff]
        %v948 = vld [vmem:[#allocation10 + $0x30] sm:$0xff]
        %v949 = vld [vmem:[#allocation10 + $0x38] sm:$0xff]
        %v950 = vld [vmem:[#allocation10 + $0x40] sm:$0xff]
        %v951 = vld [vmem:[#allocation10 + $0x48] sm:$0xff]
        %v952 = vld [vmem:[#allocation10 + $0x50] sm:$0xff]
        %v953 = vld [vmem:[#allocation10 + $0x58] sm:$0xff]
        %v954 = vld [vmem:[#allocation10 + $0x60] sm:$0xff]
        %v955 = vld [vmem:[#allocation10 + $0x68] sm:$0xff]
        %v956 = vld [vmem:[#allocation10 + $0x70] sm:$0xff]
        %v957 = vld [vmem:[#allocation10 + $0x78] sm:$0xff]
        %s958 = scalar_lea.vmem [#allocation10], 128
        %v959 = vld [vmem:[%s958] sm:$0xff]
        %v960 = vld [vmem:[%s958 + $0x8] sm:$0xff]
        %v961 = vld [vmem:[%s958 + $0x10] sm:$0xff]
        %v962 = vld [vmem:[%s958 + $0x18] sm:$0xff]
        %v963 = vld [vmem:[%s958 + $0x20] sm:$0xff]
        %v964 = vld [vmem:[%s958 + $0x28] sm:$0xff]
        %v965 = vld [vmem:[%s958 + $0x30] sm:$0xff]
        %v966 = vld [vmem:[%s958 + $0x38] sm:$0xff]
        %v967 = vld [vmem:[%s958 + $0x40] sm:$0xff]
        %v968 = vld [vmem:[%s958 + $0x48] sm:$0xff]
        %v969 = vld [vmem:[%s958 + $0x50] sm:$0xff]
        %v970 = vld [vmem:[%s958 + $0x58] sm:$0xff]
        %v971 = vld [vmem:[%s958 + $0x60] sm:$0xff]
        %v972 = vld [vmem:[%s958 + $0x68] sm:$0xff]
        %v973 = vld [vmem:[%s958 + $0x70] sm:$0xff]
        %v974 = vld [vmem:[%s958 + $0x78] sm:$0xff]
        %975 = vmatprep.subr.mxu0 0.0
        %976 = vmatpush1.msra.mxu0 %v974
        %977 = vmatprep.subr.mxu0 0.0
        %978 = vmatpush1.msra.mxu0 %v973
        %979 = vmatprep.subr.mxu0 0.0
        %980 = vmatpush1.msra.mxu0 %v972
        %981 = vmatprep.subr.mxu0 0.0
        %982 = vmatpush1.msra.mxu0 %v971
        %983 = vmatprep.subr.mxu0 0.0
        %984 = vmatpush1.msra.mxu0 %v970
        %985 = vmatprep.subr.mxu0 0.0
        %986 = vmatpush1.msra.mxu0 %v969
        %987 = vmatprep.subr.mxu0 0.0
        %988 = vmatpush1.msra.mxu0 %v968
        %989 = vmatprep.subr.mxu0 0.0
        %990 = vmatpush1.msra.mxu0 %v967
        %991 = vmatprep.subr.mxu0 0.0
        %992 = vmatpush1.msra.mxu0 %v966
        %993 = vmatprep.subr.mxu0 0.0
        %994 = vmatpush1.msra.mxu0 %v965
        %995 = vmatprep.subr.mxu0 0.0
        %996 = vmatpush1.msra.mxu0 %v964
        %997 = vmatprep.subr.mxu0 0.0
        %998 = vmatpush1.msra.mxu0 %v963
        %999 = vmatprep.subr.mxu0 0.0
        %1000 = vmatpush1.msra.mxu0 %v962
        %1001 = vmatprep.subr.mxu0 0.0
        %1002 = vmatpush1.msra.mxu0 %v961
        %1003 = vmatprep.subr.mxu0 0.0
        %1004 = vmatpush1.msra.mxu0 %v960
        %1005 = vmatprep.subr.mxu0 0.0
        %1006 = vmatpush1.msra.mxu0 %v959
        %1007 = vmatprep.subr.mxu0 0.0
        %1008 = vmatpush2.msra.mxu0 0.0
        %1009 = vmatprep.subr.mxu0 0.0
        %1010 = vmatpush2.msra.mxu0 0.0
        %1011 = vmatprep.subr.mxu0 0.0
        %1012 = vmatpush2.msra.mxu0 0.0
        %1013 = vmatprep.subr.mxu0 0.0
        %1014 = vmatpush2.msra.mxu0 0.0
        %1015 = vmatprep.subr.mxu0 0.0
        %1016 = vmatpush2.msra.mxu0 0.0
        %1017 = vmatprep.subr.mxu0 0.0
        %1018 = vmatpush2.msra.mxu0 0.0
        %1019 = vmatprep.subr.mxu0 0.0
        %1020 = vmatpush2.msra.mxu0 0.0
        %1021 = vmatprep.subr.mxu0 0.0
        %1022 = vmatpush2.msra.mxu0 0.0
        %1023 = vmatprep.subr.mxu0 0.0
        %1024 = vmatpush2.msra.mxu0 0.0
        %1025 = vmatprep.subr.mxu0 0.0
        %1026 = vmatpush2.msra.mxu0 0.0
        %1027 = vmatprep.subr.mxu0 0.0
        %1028 = vmatpush2.msra.mxu0 0.0
        %1029 = vmatprep.subr.mxu0 0.0
        %1030 = vmatpush2.msra.mxu0 0.0
        %1031 = vmatprep.subr.mxu0 0.0
        %1032 = vmatpush2.msra.mxu0 0.0
        %1033 = vmatprep.subr.mxu0 0.0
        %1034 = vmatpush2.msra.mxu0 0.0
        %1035 = vmatprep.subr.mxu0 0.0
        %1036 = vmatpush2.msra.mxu0 0.0
        %1037 = vmatprep.subr.mxu0 0.0
        %1038 = vmatpush2.msra.mxu0 0.0
        %1039 = vmatprep.mubr.f32.mxu0 0.0
        %1040 = vmatmul.mubr.f32.gmra.mxu0 %v770
        %v1041 = vpop.f32.mrf.mxu0
        %v1042 = vadd.f32 0.0, %v1041
        %v1043 = vpop.f32.mrf.mxu0
        %1044 = vdwg.mxu0
        %1045 = vmatprep.subr.mxu0 0.0
        %1046 = vmatpush1.msra.mxu0 %v957
        %1047 = vmatprep.subr.mxu0 0.0
        %1048 = vmatpush1.msra.mxu0 %v956
        %1049 = vmatprep.subr.mxu0 0.0
        %1050 = vmatpush1.msra.mxu0 %v955
        %1051 = vmatprep.subr.mxu0 0.0
        %1052 = vmatpush1.msra.mxu0 %v954
        %1053 = vmatprep.subr.mxu0 0.0
        %1054 = vmatpush1.msra.mxu0 %v953
        %1055 = vmatprep.subr.mxu0 0.0
        %1056 = vmatpush1.msra.mxu0 %v952
        %1057 = vmatprep.subr.mxu0 0.0
        %1058 = vmatpush1.msra.mxu0 %v951
        %1059 = vmatprep.subr.mxu0 0.0
        %1060 = vmatpush1.msra.mxu0 %v950
        %1061 = vmatprep.subr.mxu0 0.0
        %1062 = vmatpush1.msra.mxu0 %v949
        %1063 = vmatprep.subr.mxu0 0.0
        %1064 = vmatpush1.msra.mxu0 %v948
        %1065 = vmatprep.subr.mxu0 0.0
        %1066 = vmatpush1.msra.mxu0 %v947
        %1067 = vmatprep.subr.mxu0 0.0
        %1068 = vmatpush1.msra.mxu0 %v946
        %1069 = vmatprep.subr.mxu0 0.0
        %1070 = vmatpush1.msra.mxu0 %v945
        %1071 = vmatprep.subr.mxu0 0.0
        %1072 = vmatpush1.msra.mxu0 %v944
        %1073 = vmatprep.subr.mxu0 0.0
        %1074 = vmatpush1.msra.mxu0 %v943
        %1075 = vmatprep.subr.mxu0 0.0
        %1076 = vmatpush1.msra.mxu0 %v942
        %1077 = vmatprep.subr.mxu0 0.0
        %1078 = vmatpush2.msra.mxu0 0.0
        %1079 = vmatprep.subr.mxu0 0.0
        %1080 = vmatpush2.msra.mxu0 0.0
        %1081 = vmatprep.subr.mxu0 0.0
        %1082 = vmatpush2.msra.mxu0 0.0
        %1083 = vmatprep.subr.mxu0 0.0
        %1084 = vmatpush2.msra.mxu0 0.0
        %1085 = vmatprep.subr.mxu0 0.0
        %1086 = vmatpush2.msra.mxu0 0.0
        %1087 = vmatprep.subr.mxu0 0.0
        %1088 = vmatpush2.msra.mxu0 0.0
        %1089 = vmatprep.subr.mxu0 0.0
        %1090 = vmatpush2.msra.mxu0 0.0
        %1091 = vmatprep.subr.mxu0 0.0
        %1092 = vmatpush2.msra.mxu0 0.0
        %1093 = vmatprep.subr.mxu0 0.0
        %1094 = vmatpush2.msra.mxu0 0.0
        %1095 = vmatprep.subr.mxu0 0.0
        %1096 = vmatpush2.msra.mxu0 0.0
        %1097 = vmatprep.subr.mxu0 0.0
        %1098 = vmatpush2.msra.mxu0 0.0
        %1099 = vmatprep.subr.mxu0 0.0
        %1100 = vmatpush2.msra.mxu0 0.0
        %1101 = vmatprep.subr.mxu0 0.0
        %1102 = vmatpush2.msra.mxu0 0.0
        %1103 = vmatprep.subr.mxu0 0.0
        %1104 = vmatpush2.msra.mxu0 0.0
        %1105 = vmatprep.subr.mxu0 0.0
        %1106 = vmatpush2.msra.mxu0 0.0
        %1107 = vmatprep.subr.mxu0 0.0
        %1108 = vmatpush2.msra.mxu0 0.0
        %1109 = vmatprep.mubr.f32.mxu0 0.0
        %1110 = vmatmul.mubr.f32.gmra.mxu0 %v932
        %v1111 = vpop.f32.mrf.mxu0
        %v1112 = vadd.f32 %v1042, %v1111
        %v1113 = vpop.f32.mrf.mxu0
        %1114 = vdwg.mxu0
        %s1115 = scalar_lea.vmem [#allocation10], 256
        %v1116 = vld [vmem:[%s1115] sm:$0xff]
        %v1117 = vld [vmem:[%s1115 + $0x8] sm:$0xff]
        %v1118 = vld [vmem:[%s1115 + $0x10] sm:$0xff]
        %v1119 = vld [vmem:[%s1115 + $0x18] sm:$0xff]
        %v1120 = vld [vmem:[%s1115 + $0x20] sm:$0xff]
        %v1121 = vld [vmem:[%s1115 + $0x28] sm:$0xff]
        %v1122 = vld [vmem:[%s1115 + $0x30] sm:$0xff]
        %v1123 = vld [vmem:[%s1115 + $0x38] sm:$0xff]
        %v1124 = vld [vmem:[%s1115 + $0x40] sm:$0xff]
        %v1125 = vld [vmem:[%s1115 + $0x48] sm:$0xff]
        %v1126 = vld [vmem:[%s1115 + $0x50] sm:$0xff]
        %v1127 = vld [vmem:[%s1115 + $0x58] sm:$0xff]
        %v1128 = vld [vmem:[%s1115 + $0x60] sm:$0xff]
        %v1129 = vld [vmem:[%s1115 + $0x68] sm:$0xff]
        %v1130 = vld [vmem:[%s1115 + $0x70] sm:$0xff]
        %v1131 = vld [vmem:[%s1115 + $0x78] sm:$0xff]
        %1132 = vmatprep.subr.mxu0 0.0
        %1133 = vmatpush1.msra.mxu0 %v1131
        %1134 = vmatprep.subr.mxu0 0.0
        %1135 = vmatpush1.msra.mxu0 %v1130
        %1136 = vmatprep.subr.mxu0 0.0
        %1137 = vmatpush1.msra.mxu0 %v1129
        %1138 = vmatprep.subr.mxu0 0.0
        %1139 = vmatpush1.msra.mxu0 %v1128
        %1140 = vmatprep.subr.mxu0 0.0
        %1141 = vmatpush1.msra.mxu0 %v1127
        %1142 = vmatprep.subr.mxu0 0.0
        %1143 = vmatpush1.msra.mxu0 %v1126
        %1144 = vmatprep.subr.mxu0 0.0
        %1145 = vmatpush1.msra.mxu0 %v1125
        %1146 = vmatprep.subr.mxu0 0.0
        %1147 = vmatpush1.msra.mxu0 %v1124
        %1148 = vmatprep.subr.mxu0 0.0
        %1149 = vmatpush1.msra.mxu0 %v1123
        %1150 = vmatprep.subr.mxu0 0.0
        %1151 = vmatpush1.msra.mxu0 %v1122
        %1152 = vmatprep.subr.mxu0 0.0
        %1153 = vmatpush1.msra.mxu0 %v1121
        %1154 = vmatprep.subr.mxu0 0.0
        %1155 = vmatpush1.msra.mxu0 %v1120
        %1156 = vmatprep.subr.mxu0 0.0
        %1157 = vmatpush1.msra.mxu0 %v1119
        %1158 = vmatprep.subr.mxu0 0.0
        %1159 = vmatpush1.msra.mxu0 %v1118
        %1160 = vmatprep.subr.mxu0 0.0
        %1161 = vmatpush1.msra.mxu0 %v1117
        %1162 = vmatprep.subr.mxu0 0.0
        %1163 = vmatpush1.msra.mxu0 %v1116
        %1164 = vmatprep.subr.mxu0 0.0
        %1165 = vmatpush2.msra.mxu0 0.0
        %1166 = vmatprep.subr.mxu0 0.0
        %1167 = vmatpush2.msra.mxu0 0.0
        %1168 = vmatprep.subr.mxu0 0.0
        %1169 = vmatpush2.msra.mxu0 0.0
        %1170 = vmatprep.subr.mxu0 0.0
        %1171 = vmatpush2.msra.mxu0 0.0
        %1172 = vmatprep.subr.mxu0 0.0
        %1173 = vmatpush2.msra.mxu0 0.0
        %1174 = vmatprep.subr.mxu0 0.0
        %1175 = vmatpush2.msra.mxu0 0.0
        %1176 = vmatprep.subr.mxu0 0.0
        %1177 = vmatpush2.msra.mxu0 0.0
        %1178 = vmatprep.subr.mxu0 0.0
        %1179 = vmatpush2.msra.mxu0 0.0
        %1180 = vmatprep.subr.mxu0 0.0
        %1181 = vmatpush2.msra.mxu0 0.0
        %1182 = vmatprep.subr.mxu0 0.0
        %1183 = vmatpush2.msra.mxu0 0.0
        %1184 = vmatprep.subr.mxu0 0.0
        %1185 = vmatpush2.msra.mxu0 0.0
        %1186 = vmatprep.subr.mxu0 0.0
        %1187 = vmatpush2.msra.mxu0 0.0
        %1188 = vmatprep.subr.mxu0 0.0
        %1189 = vmatpush2.msra.mxu0 0.0
        %1190 = vmatprep.subr.mxu0 0.0
        %1191 = vmatpush2.msra.mxu0 0.0
        %1192 = vmatprep.subr.mxu0 0.0
        %1193 = vmatpush2.msra.mxu0 0.0
        %1194 = vmatprep.subr.mxu0 0.0
        %1195 = vmatpush2.msra.mxu0 0.0
        %1196 = vmatprep.mubr.f32.mxu0 0.0
        %1197 = vmatmul.mubr.f32.gmra.mxu0 %v941
        %v1198 = vpop.f32.mrf.mxu0
        %v1199 = vadd.f32 0.0, %v1198
        %v1200 = vpop.f32.mrf.mxu0
        %1201 = vdwg.mxu0
        %v1202 = vadd.f32 %v1112, %v1199
        %v1203 = vld [vmem:[%s6] sm:$0x1]
        %v1205 = vlaneseq
        %v1206 = vshrl.u32 %v1205, 7
        %v1207 = vsub.s32 0, %v1206
        %v1208 = vrot.slane %v1203, %v1207
        %v1210 = vadd.f32 %v1202, %v1208
        %vm1211 = vcmp.ge.f32.partialorder %v1210, 0.0
        %v1212 = vmul.f32 %v1210, 0.1
        %v1213 = vsel %vm1211, %v1210, %v1212
        %v1214 = vld [vmem:[#allocation11] sm:$0xff]
        %v1215 = vld [vmem:[#allocation11 + $0x8] sm:$0xff]
        %v1216 = vld [vmem:[#allocation11 + $0x10] sm:$0xff]
        %v1217 = vld [vmem:[#allocation11 + $0x18] sm:$0xff]
        %v1218 = vld [vmem:[#allocation11 + $0x20] sm:$0xff]
        %v1219 = vld [vmem:[#allocation11 + $0x28] sm:$0xff]
        %v1220 = vld [vmem:[#allocation11 + $0x30] sm:$0xff]
        %v1221 = vld [vmem:[#allocation11 + $0x38] sm:$0xff]
        %v1222 = vld [vmem:[#allocation11 + $0x40] sm:$0xff]
        %v1223 = vld [vmem:[#allocation11 + $0x48] sm:$0xff]
        %v1224 = vld [vmem:[#allocation11 + $0x50] sm:$0xff]
        %v1225 = vld [vmem:[#allocation11 + $0x58] sm:$0xff]
        %v1226 = vld [vmem:[#allocation11 + $0x60] sm:$0xff]
        %v1227 = vld [vmem:[#allocation11 + $0x68] sm:$0xff]
        %v1228 = vld [vmem:[#allocation11 + $0x70] sm:$0xff]
        %v1229 = vld [vmem:[#allocation11 + $0x78] sm:$0xff]
        %v1230 = vld [vmem:[%s8] sm:$0x1]
        %v1232 = vlaneseq
        %v1233 = vshrl.u32 %v1232, 7
        %v1234 = vsub.s32 0, %v1233
        %v1235 = vrot.slane %v1230, %v1234
        %1237 = vmatprep.subr.mxu0 0.0
        %1238 = vmatpush1.msra.mxu0 %v1229
        %1239 = vmatprep.subr.mxu0 0.0
        %1240 = vmatpush1.msra.mxu0 %v1228
        %1241 = vmatprep.subr.mxu0 0.0
        %1242 = vmatpush1.msra.mxu0 %v1227
        %1243 = vmatprep.subr.mxu0 0.0
        %1244 = vmatpush1.msra.mxu0 %v1226
        %1245 = vmatprep.subr.mxu0 0.0
        %1246 = vmatpush1.msra.mxu0 %v1225
        %1247 = vmatprep.subr.mxu0 0.0
        %1248 = vmatpush1.msra.mxu0 %v1224
        %1249 = vmatprep.subr.mxu0 0.0
        %1250 = vmatpush1.msra.mxu0 %v1223
        %1251 = vmatprep.subr.mxu0 0.0
        %1252 = vmatpush1.msra.mxu0 %v1222
        %1253 = vmatprep.subr.mxu0 0.0
        %1254 = vmatpush1.msra.mxu0 %v1221
        %1255 = vmatprep.subr.mxu0 0.0
        %1256 = vmatpush1.msra.mxu0 %v1220
        %1257 = vmatprep.subr.mxu0 0.0
        %1258 = vmatpush1.msra.mxu0 %v1219
        %1259 = vmatprep.subr.mxu0 0.0
        %1260 = vmatpush1.msra.mxu0 %v1218
        %1261 = vmatprep.subr.mxu0 0.0
        %1262 = vmatpush1.msra.mxu0 %v1217
        %1263 = vmatprep.subr.mxu0 0.0
        %1264 = vmatpush1.msra.mxu0 %v1216
        %1265 = vmatprep.subr.mxu0 0.0
        %1266 = vmatpush1.msra.mxu0 %v1215
        %1267 = vmatprep.subr.mxu0 0.0
        %1268 = vmatpush1.msra.mxu0 %v1214
        %1269 = vmatprep.subr.mxu0 0.0
        %1270 = vmatpush2.msra.mxu0 0.0
        %1271 = vmatprep.subr.mxu0 0.0
        %1272 = vmatpush2.msra.mxu0 0.0
        %1273 = vmatprep.subr.mxu0 0.0
        %1274 = vmatpush2.msra.mxu0 0.0
        %1275 = vmatprep.subr.mxu0 0.0
        %1276 = vmatpush2.msra.mxu0 0.0
        %1277 = vmatprep.subr.mxu0 0.0
        %1278 = vmatpush2.msra.mxu0 0.0
        %1279 = vmatprep.subr.mxu0 0.0
        %1280 = vmatpush2.msra.mxu0 0.0
        %1281 = vmatprep.subr.mxu0 0.0
        %1282 = vmatpush2.msra.mxu0 0.0
        %1283 = vmatprep.subr.mxu0 0.0
        %1284 = vmatpush2.msra.mxu0 0.0
        %1285 = vmatprep.subr.mxu0 0.0
        %1286 = vmatpush2.msra.mxu0 0.0
        %1287 = vmatprep.subr.mxu0 0.0
        %1288 = vmatpush2.msra.mxu0 0.0
        %1289 = vmatprep.subr.mxu0 0.0
        %1290 = vmatpush2.msra.mxu0 0.0
        %1291 = vmatprep.subr.mxu0 0.0
        %1292 = vmatpush2.msra.mxu0 0.0
        %1293 = vmatprep.subr.mxu0 0.0
        %1294 = vmatpush2.msra.mxu0 0.0
        %1295 = vmatprep.subr.mxu0 0.0
        %1296 = vmatpush2.msra.mxu0 0.0
        %1297 = vmatprep.subr.mxu0 0.0
        %1298 = vmatpush2.msra.mxu0 0.0
        %1299 = vmatprep.subr.mxu0 0.0
        %1300 = vmatpush2.msra.mxu0 0.0
        %1301 = vmatprep.mubr.f32.mxu0 0.0
        %1302 = vmatmul.mubr.f32.gmra.mxu0 %v1213
        %v1303 = vpop.f32.mrf.mxu0
        %v1304 = vadd.f32 %v1235, %v1303
        %v1305 = vpop.f32.mrf.mxu0
        %1306 = vdwg.mxu0
        %v1307 = vadd.f32 %v1304, %v689
        %vm1308 = vcmp.ge.f32.partialorder %v1307, 0.0
        %v1309 = vmul.f32 %v1307, 0.1
        %v1310 = vsel %vm1308, %v1307, %v1309
        %1311 = vst [vmem:[%s574] sm:$0xff] %v1310
        %s1312 = sand.u32 %s319, 1
        %s1313 = scalar_lea.sflag [#allocation4], %s1312
        %s1314 = sand.u32 %s319, 1
        %s1315 = smul.addr %s1314, 8
        %s1316 = scalar_lea.vmem [#allocation14], %s1315
        // Predicated region
        $region93: #{tpu_custom_call.1} parent=63 // pred_check
          %p1317 = pneg %p329
        $region94: #{tpu_custom_call.1} parent=63 // pred_check_branch
          %1319 = sbr.rel (%p1317) target = $region96
        $region95: #{tpu_custom_call.1} parent=63 // pred_region
          %s1321 = ssub.s32 128, 128
          %1322 = vsyncadd %s1313, %s1321
          %s1323 = smul.addr %s37, 3
          %s1324 = sadd.s32 %s38, %s1323
          %s1325 = smul.addr %s1324, 128
          %s1326 = scalar_lea.hbm %s11, %s1325
          %s1328 = sshll.u32 %s1316, 4
          %s1329 = int_to_ptr.vmem [resolvable:$true] %s1328
          %1331 = dma.vmem_to_hbm [thread:$0]  %s1329, 128, %s1326, %s1313
        $region96: #{tpu_custom_call.1} parent=63 // pred_fallthru
          _
      $region64: #{tpu_custom_call.1} parent=5 // pred_fallthru
        _
      %p1332 = scmp.le.s32.totalorder 2, %s28
      // Predicated region
      $region97: #{tpu_custom_call.1} parent=5 // pred_check
        %p1333 = pneg %p1332
      $region98: #{tpu_custom_call.1} parent=5 // pred_check_branch
        %1335 = sbr.rel (%p1333) target = $region100
      $region99: #{tpu_custom_call.1} parent=5 // pred_region
        %s1336 = ssub.s32 %s28, 2
        // Predicated region
        $region101: #{tpu_custom_call.1} parent=99 // pred_check
          %p1337 = pneg %p335
        $region102: #{tpu_custom_call.1} parent=99 // pred_check_branch
          %1339 = sbr.rel (%p1337) target = $region104
        $region103: #{tpu_custom_call.1} parent=99 // pred_region
          %s1340 = sand.u32 %s320, 1
          %s1341 = scalar_lea.sflag [#allocation4], %s1340
          %s1342 = sand.u32 %s320, 1
          %s1343 = smul.addr %s1342, 8
          %s1344 = scalar_lea.vmem [#allocation14], %s1343
          %1345 = dma.done %s1341, 128
        $region104: #{tpu_custom_call.1} parent=99 // pred_fallthru
          _
      $region100: #{tpu_custom_call.1} parent=5 // pred_fallthru
        _
    $region6: #{tpu_custom_call.1} parent=1 // loop_footer
      %s32 = sadd.s32 1, %s28
    $region7: #{tpu_custom_call.1} parent=1 // loop_footer_branch
      %27 = sbr.rel target = $region3
    $region8: #{tpu_custom_call.1} parent=1 // loop_exit
      _
    %1346 = vsyncpa [#allocation3], 1
    %s1347 = scalar_lea.sflag [#allocation3], 1
    %1348 = vsyncpa %s1347, 1
    %1349 = vsyncpa [#allocation6], 1
    %s1350 = scalar_lea.sflag [#allocation6], 1
    %1351 = vsyncpa %s1350, 1
    %1352 = vsyncpa [#allocation9], 1
    %1353 = vsyncpa [#allocation12], 1
    %1354 = vsyncpa [#allocation4], 1
    %s1355 = scalar_lea.sflag [#allocation4], 1
    %1356 = vsyncpa %s1355, 1

</llo_original>
